<compile_context>
chip_gen: v5e
topology: v5e:2x2
jax: 0.10.0
libtpu: 0.0.40
codegen_flags: <defaults>
</compile_context>

<pallas_src>
import jax
import jax.numpy as jnp
import numpy as np
from jax import lax
from jax.experimental import pallas as pl
from jax.experimental.pallas import tpu as pltpu

KSIZE = 3
PAD = 1
KK = KSIZE * KSIZE * KSIZE
EPS = 1e-5
LANE = 128
_MAX_TILE_ROWS = 512            # rows per tile; 512-2048 hits HBM roofline, 512 is v7x-safe
_VMEM_LIMIT = 32 * 1024 * 1024  # explicit scoped-VMEM limit, safe on v5e/v6e/v7x


def _round_up(x, m):
    return (x + m - 1) // m * m


def _pick_row_tile(M, max_rows):
    """Largest multiple-of-8 divisor of M that is <= max_rows (fallback: M)."""
    best = M
    for cand in range(8, min(M, max_rows) + 1, 8):
        if M % cand == 0:
            best = cand
    return best


# ----------------------------- Pallas kernels ------------------------------ #

def _conv_stats_kernel(p_ref, w_ref, o_ref, ssum_ref, ssq_ref):
    """Fused-K conv tile + BN partial statistics.

    p_ref:    (Mt, Kp)  bf16 im2col rows (K = 27*Cin zero-padded to Kp)
    w_ref:    (Kp, Cp)  bf16 fused weights (Cout zero-padded to Cp)
    o_ref:    (Mt, Cp)  f32 conv output tile
    ssum_ref: (1, Cp)   f32 per-tile channel sum
    ssq_ref:  (1, Cp)   f32 per-tile channel sum of squares
    """
    acc = jnp.dot(p_ref[...], w_ref[...], preferred_element_type=jnp.float32)
    o_ref[...] = acc
    ssum_ref[...] = jnp.sum(acc, axis=0, keepdims=True)
    ssq_ref[...] = jnp.sum(acc * acc, axis=0, keepdims=True)


def _bn_relu_apply_kernel(y_ref, sc_ref, sh_ref, o_ref):
    """Apply y * scale + shift, then ReLU (scale/shift fold mean/var/gamma/beta)."""
    o_ref[...] = jnp.maximum(y_ref[...] * sc_ref[...] + sh_ref[...], 0.0)


# ------------------------------- JAX wrapper -------------------------------- #

def cbr_forward(x_ncdhw, w_oidhw, conv_bias, gamma, beta):
    """CBR forward. Input/output in PyTorch NCDHW layout, float32."""
    # conv_bias is intentionally unused: training-mode BatchNorm subtracts the
    # batch mean, which cancels a constant per-channel bias exactly.
    del conv_bias

    N, Cin, D, H, W = x_ncdhw.shape
    Cout = w_oidhw.shape[0]
    M = D * H * W
    Kp = _round_up(KK * Cin, LANE)
    Cp = _round_up(Cout, LANE)

    Mt = _pick_row_tile(M, _MAX_TILE_ROWS)
    T = M // Mt

    # --- fused-K im2col, channels last, bf16, lane-padded ------------------- #
    x = jnp.transpose(x_ncdhw, (0, 2, 3, 4, 1)).astype(jnp.bfloat16)   # NDHWC
    xp = jnp.pad(x, ((0, 0), (PAD, PAD), (PAD, PAD), (PAD, PAD), (0, 0)))
    taps = []
    for kd in range(KSIZE):
        for kh in range(KSIZE):
            for kw in range(KSIZE):
                taps.append(xp[:, kd:kd + D, kh:kh + H, kw:kw + W, :])
    patches = jnp.concatenate(taps, axis=-1).reshape(N, M, KK * Cin)
    patches = jnp.pad(patches, ((0, 0), (0, 0), (0, Kp - KK * Cin)))   # (N, M, Kp) bf16

    # (Cout, Cin, kd, kh, kw) -> (kd, kh, kw, Cin, Cout) -> (Kp, Cp), bf16
    w_fused = jnp.transpose(w_oidhw, (2, 3, 4, 1, 0)).reshape(KK * Cin, Cout)
    w_fused = jnp.pad(w_fused, ((0, Kp - KK * Cin), (0, Cp - Cout))).astype(jnp.bfloat16)

    # --- pass 1: conv + per-tile BN statistics ------------------------------ #
    conv_out, tile_sum, tile_sq = pl.pallas_call(
        _conv_stats_kernel,
        out_shape=(
            jax.ShapeDtypeStruct((N, M, Cp), jnp.float32),
            jax.ShapeDtypeStruct((N, T, 1, Cp), jnp.float32),
            jax.ShapeDtypeStruct((N, T, 1, Cp), jnp.float32),
        ),
        grid=(N, T),
        in_specs=[
            pl.BlockSpec((None, Mt, Kp), lambda n, t: (n, t, 0)),
            pl.BlockSpec((Kp, Cp), lambda n, t: (0, 0)),
        ],
        out_specs=(
            pl.BlockSpec((None, Mt, Cp), lambda n, t: (n, t, 0)),
            pl.BlockSpec((None, None, 1, Cp), lambda n, t: (n, t, 0, 0)),
            pl.BlockSpec((None, None, 1, Cp), lambda n, t: (n, t, 0, 0)),
        ),
        compiler_params=pltpu.CompilerParams(
            dimension_semantics=("parallel", "parallel"),
            vmem_limit_bytes=_VMEM_LIMIT),
    )(patches, w_fused)

    # --- fold partial sums into BN scale/shift (tiny, stays in XLA) --------- #
    count = jnp.float32(N * M)
    total_sum = jnp.sum(tile_sum, axis=(0, 1, 2))                      # (Cp,)
    total_sq = jnp.sum(tile_sq, axis=(0, 1, 2))                        # (Cp,)
    mean = total_sum / count
    var = jnp.maximum(total_sq / count - mean * mean, 0.0)             # biased var
    gamma_p = jnp.pad(gamma.astype(jnp.float32), (0, Cp - Cout))
    beta_p = jnp.pad(beta.astype(jnp.float32), (0, Cp - Cout))
    inv = lax.rsqrt(var + EPS)
    scale = (gamma_p * inv).reshape(1, Cp)
    shift = (beta_p - mean * gamma_p * inv).reshape(1, Cp)

    # --- pass 2: normalize + ReLU, in place over the conv output ------------ #
    out_pad = pl.pallas_call(
        _bn_relu_apply_kernel,
        out_shape=jax.ShapeDtypeStruct((N, M, Cp), jnp.float32),
        grid=(N, T),
        in_specs=[
            pl.BlockSpec((None, Mt, Cp), lambda n, t: (n, t, 0)),
            pl.BlockSpec((1, Cp), lambda n, t: (0, 0)),
            pl.BlockSpec((1, Cp), lambda n, t: (0, 0)),
        ],
        out_specs=pl.BlockSpec((None, Mt, Cp), lambda n, t: (n, t, 0)),
        input_output_aliases={0: 0},
        compiler_params=pltpu.CompilerParams(
            dimension_semantics=("parallel", "parallel"),
            vmem_limit_bytes=_VMEM_LIMIT),
    )(conv_out, scale, shift)

    out = out_pad[:, :, :Cout].reshape(N, D, H, W, Cout)
    return jnp.transpose(out, (0, 4, 1, 2, 3))                         # NDHWC -> NCDHW


# ----------------------------- pure-JAX reference --------------------------- #

def cbr_reference(x_ncdhw, w_oidhw, conv_bias, gamma, beta):
    x = jnp.transpose(x_ncdhw, (0, 2, 3, 4, 1)).astype(jnp.float32)
    w_dhwio = jnp.transpose(w_oidhw, (2, 3, 4, 1, 0)).astype(jnp.float32)
    y = lax.conv_general_dilated(
        x, w_dhwio, window_strides=(1, 1, 1),
        padding=((PAD, PAD), (PAD, PAD), (PAD, PAD)),
        dimension_numbers=("NDHWC", "DHWIO", "NDHWC"))
    y = y + conv_bias.reshape(1, 1, 1, 1, -1)
    mean = jnp.mean(y, axis=(0, 1, 2, 3), keepdims=True)
    var = jnp.mean((y - mean) ** 2, axis=(0, 1, 2, 3), keepdims=True)
    out = (y - mean) * lax.rsqrt(var + EPS) * gamma.reshape(1, 1, 1, 1, -1) \
        + beta.reshape(1, 1, 1, 1, -1)
    out = jnp.maximum(out, 0.0)
    return jnp.transpose(out, (0, 4, 1, 2, 3))


# --------------------------------- main ------------------------------------ #

if __name__ == "__main__":
    key = jax.random.PRNGKey(0)
    k_x, k_w, k_b, k_g, k_bt = jax.random.split(key, 5)

    N, Cin, D, H, W = 2, 4, 16, 8, 8
    Cout = 8

    x = jax.random.normal(k_x, (N, Cin, D, H, W), dtype=jnp.float32)

    fan_in = Cin * KSIZE * KSIZE * KSIZE
    bound = 1.0 / np.sqrt(fan_in)
    w = jax.random.uniform(k_w, (Cout, Cin, KSIZE, KSIZE, KSIZE),
                           minval=-bound, maxval=bound, dtype=jnp.float32)
    conv_bias = jax.random.uniform(k_b, (Cout,), minval=-bound, maxval=bound,
                                   dtype=jnp.float32)
    gamma = jax.random.uniform(k_g, (Cout,), minval=0.5, maxval=1.5,
                               dtype=jnp.float32)
    beta = jax.random.uniform(k_bt, (Cout,), minval=-0.5, maxval=0.5,
                              dtype=jnp.float32)

    out = jax.jit(cbr_forward)(x, w, conv_bias, gamma, beta)
    out = jax.block_until_ready(out)
    assert out.shape == (N, Cout, D, H, W)

    # Reference with x / weights quantized to bf16 (exactly what the kernel
    # feeds the MXU); isolates kernel logic from bf16 input rounding.
    xq = x.astype(jnp.bfloat16).astype(jnp.float32)
    wq = w.astype(jnp.bfloat16).astype(jnp.float32)
    ref = cbr_reference(xq, wq, conv_bias, gamma, beta)
    np.testing.assert_allclose(np.asarray(out), np.asarray(ref),
                               rtol=2e-3, atol=2e-3)

    print("KERNEL_OK")
</pallas_src>

<mosaic_0001>
module attributes {stable_mosaic.version = 11 : i64} {
  func.func @_conv_stats_kernel(%arg0: i32, %arg1: i32, %arg2: memref<1x512x128xbf16, #tpu.memory_space<vmem>>, %arg3: memref<128x128xbf16, #tpu.memory_space<vmem>>, %arg4: memref<1x512x128xf32, #tpu.memory_space<vmem>>, %arg5: memref<1x1x1x128xf32, #tpu.memory_space<vmem>>, %arg6: memref<1x1x1x128xf32, #tpu.memory_space<vmem>>) attributes {dimension_semantics = [#tpu.dimension_semantics<parallel>, #tpu.dimension_semantics<parallel>], iteration_bounds = array<i64: 2, 2>, scalar_prefetch = 0 : i64, scratch_operands = 0 : i64, tpu.core_type = #tpu.core_type<tc>, window_params = [{transform_indices = @transform_0, window_bounds = array<i64: 1, 512, 128>}, {pipeline_mode = #tpu.pipeline_mode<synchronous>, transform_indices = @transform_1, window_bounds = array<i64: 128, 128>}, {transform_indices = @transform_2, window_bounds = array<i64: 1, 512, 128>}, {transform_indices = @transform_3, window_bounds = array<i64: 1, 1, 1, 128>}, {transform_indices = @transform_4, window_bounds = array<i64: 1, 1, 1, 128>}]} {
    %c0 = arith.constant 0 : index
    %c0_0 = arith.constant 0 : index
    %c0_1 = arith.constant 0 : index
    %0 = vector.load %arg2[%c0, %c0_0, %c0_1] : memref<1x512x128xbf16, #tpu.memory_space<vmem>>, vector<1x512x128xbf16>
    %1 = vector.shape_cast %0 : vector<1x512x128xbf16> to vector<512x128xbf16>
    %c0_2 = arith.constant 0 : index
    %c0_3 = arith.constant 0 : index
    %2 = vector.load %arg3[%c0_2, %c0_3] : memref<128x128xbf16, #tpu.memory_space<vmem>>, vector<128x128xbf16>
    %cst = arith.constant dense<0.000000e+00> : vector<512x128xf32>
    %3 = tpu.matmul %1, %2, %cst {dimension_numbers = #tpu.dot_dimension_numbers<[1], [0], [0], [1], [0, 0, 1, 1], [], []>} : vector<512x128xbf16>, vector<128x128xbf16>, vector<512x128xf32> -> vector<512x128xf32>
    %c0_4 = arith.constant 0 : index
    %c0_5 = arith.constant 0 : index
    %c0_6 = arith.constant 0 : index
    %4 = vector.load %arg4[%c0_4, %c0_5, %c0_6] : memref<1x512x128xf32, #tpu.memory_space<vmem>>, vector<1x512x128xf32>
    %5 = vector.shape_cast %4 : vector<1x512x128xf32> to vector<512x128xf32>
    %6 = vector.shape_cast %3 : vector<512x128xf32> to vector<1x512x128xf32>
    tpu.vector_store %arg4[%c0_4, %c0_5, %c0_6], %6 {strides = array<i32>} : memref<1x512x128xf32, #tpu.memory_space<vmem>>, vector<1x512x128xf32>,
    %cst_7 = arith.constant dense<0.000000e+00> : vector<128xf32>
    %7 = vector.multi_reduction <add>, %3, %cst_7 [0] : vector<512x128xf32> to vector<128xf32>
    %8 = vector.shape_cast %7 : vector<128xf32> to vector<1x128xf32>
    %c0_8 = arith.constant 0 : index
    %c0_9 = arith.constant 0 : index
    %c0_10 = arith.constant 0 : index
    %c0_11 = arith.constant 0 : index
    %9 = vector.load %arg5[%c0_8, %c0_9, %c0_10, %c0_11] : memref<1x1x1x128xf32, #tpu.memory_space<vmem>>, vector<1x1x1x128xf32>
    %10 = vector.shape_cast %9 : vector<1x1x1x128xf32> to vector<1x128xf32>
    %11 = vector.shape_cast %8 : vector<1x128xf32> to vector<1x1x1x128xf32>
    tpu.vector_store %arg5[%c0_8, %c0_9, %c0_10, %c0_11], %11 {strides = array<i32>} : memref<1x1x1x128xf32, #tpu.memory_space<vmem>>, vector<1x1x1x128xf32>,
    %12 = arith.mulf %3, %3 : vector<512x128xf32>
    %cst_12 = arith.constant dense<0.000000e+00> : vector<128xf32>
    %13 = vector.multi_reduction <add>, %12, %cst_12 [0] : vector<512x128xf32> to vector<128xf32>
    %14 = vector.shape_cast %13 : vector<128xf32> to vector<1x128xf32>
    %c0_13 = arith.constant 0 : index
    %c0_14 = arith.constant 0 : index
    %c0_15 = arith.constant 0 : index
    %c0_16 = arith.constant 0 : index
    %15 = vector.load %arg6[%c0_13, %c0_14, %c0_15, %c0_16] : memref<1x1x1x128xf32, #tpu.memory_space<vmem>>, vector<1x1x1x128xf32>
    %16 = vector.shape_cast %15 : vector<1x1x1x128xf32> to vector<1x128xf32>
    %17 = vector.shape_cast %14 : vector<1x128xf32> to vector<1x1x1x128xf32>
    tpu.vector_store %arg6[%c0_13, %c0_14, %c0_15, %c0_16], %17 {strides = array<i32>} : memref<1x1x1x128xf32, #tpu.memory_space<vmem>>, vector<1x1x1x128xf32>,
    return
  }
  func.func @transform_0(%arg0: i32, %arg1: i32) -> (i32, i32, i32) {
    %c0_i32 = arith.constant 0 : i32
    %c0_i32_0 = arith.constant 0 : i32
    return %arg0, %arg1, %c0_i32 : i32, i32, i32
  }
  func.func @transform_1(%arg0: i32, %arg1: i32) -> (i32, i32) {
    %c0_i32 = arith.constant 0 : i32
    %c0_i32_0 = arith.constant 0 : i32
    %c0_i32_1 = arith.constant 0 : i32
    return %c0_i32, %c0_i32_0 : i32, i32
  }
  func.func @transform_2(%arg0: i32, %arg1: i32) -> (i32, i32, i32) {
    %c0_i32 = arith.constant 0 : i32
    %c0_i32_0 = arith.constant 0 : i32
    return %arg0, %arg1, %c0_i32 : i32, i32, i32
  }
  func.func @transform_3(%arg0: i32, %arg1: i32) -> (i32, i32, i32, i32) {
    %c0_i32 = arith.constant 0 : i32
    %c0_i32_0 = arith.constant 0 : i32
    %c0_i32_1 = arith.constant 0 : i32
    return %arg0, %arg1, %c0_i32, %c0_i32_0 : i32, i32, i32, i32
  }
  func.func @transform_4(%arg0: i32, %arg1: i32) -> (i32, i32, i32, i32) {
    %c0_i32 = arith.constant 0 : i32
    %c0_i32_0 = arith.constant 0 : i32
    %c0_i32_1 = arith.constant 0 : i32
    return %arg0, %arg1, %c0_i32, %c0_i32_0 : i32, i32, i32, i32
  }
}

module attributes {stable_mosaic.version = 11 : i64} {
  func.func @_bn_relu_apply_kernel(%arg0: i32, %arg1: i32, %arg2: memref<1x512x128xf32, #tpu.memory_space<vmem>>, %arg3: memref<1x128xf32, #tpu.memory_space<vmem>>, %arg4: memref<1x128xf32, #tpu.memory_space<vmem>>, %arg5: memref<1x512x128xf32, #tpu.memory_space<vmem>>) attributes {dimension_semantics = [#tpu.dimension_semantics<parallel>, #tpu.dimension_semantics<parallel>], iteration_bounds = array<i64: 2, 2>, scalar_prefetch = 0 : i64, scratch_operands = 0 : i64, tpu.core_type = #tpu.core_type<tc>, window_params = [{transform_indices = @transform_0, window_bounds = array<i64: 1, 512, 128>}, {pipeline_mode = #tpu.pipeline_mode<synchronous>, transform_indices = @transform_1, window_bounds = array<i64: 1, 128>}, {pipeline_mode = #tpu.pipeline_mode<synchronous>, transform_indices = @transform_2, window_bounds = array<i64: 1, 128>}, {transform_indices = @transform_3, window_bounds = array<i64: 1, 512, 128>}]} {
    %c0 = arith.constant 0 : index
    %c0_0 = arith.constant 0 : index
    %c0_1 = arith.constant 0 : index
    %0 = vector.load %arg2[%c0, %c0_0, %c0_1] : memref<1x512x128xf32, #tpu.memory_space<vmem>>, vector<1x512x128xf32>
    %1 = vector.shape_cast %0 : vector<1x512x128xf32> to vector<512x128xf32>
    %c0_2 = arith.constant 0 : index
    %c0_3 = arith.constant 0 : index
    %2 = vector.load %arg3[%c0_2, %c0_3] : memref<1x128xf32, #tpu.memory_space<vmem>>, vector<1x128xf32>
    %3 = vector.broadcast %2 : vector<1x128xf32> to vector<512x128xf32>
    %4 = arith.mulf %1, %3 : vector<512x128xf32>
    %c0_4 = arith.constant 0 : index
    %c0_5 = arith.constant 0 : index
    %5 = vector.load %arg4[%c0_4, %c0_5] : memref<1x128xf32, #tpu.memory_space<vmem>>, vector<1x128xf32>
    %6 = vector.broadcast %5 : vector<1x128xf32> to vector<512x128xf32>
    %7 = arith.addf %4, %6 : vector<512x128xf32>
    %cst = arith.constant 0.000000e+00 : f32
    %8 = vector.broadcast %cst : f32 to vector<512x128xf32>
    %9 = arith.maximumf %7, %8 : vector<512x128xf32>
    %c0_6 = arith.constant 0 : index
    %c0_7 = arith.constant 0 : index
    %c0_8 = arith.constant 0 : index
    %10 = vector.load %arg5[%c0_6, %c0_7, %c0_8] : memref<1x512x128xf32, #tpu.memory_space<vmem>>, vector<1x512x128xf32>
    %11 = vector.shape_cast %10 : vector<1x512x128xf32> to vector<512x128xf32>
    %12 = vector.shape_cast %9 : vector<512x128xf32> to vector<1x512x128xf32>
    tpu.vector_store %arg5[%c0_6, %c0_7, %c0_8], %12 {strides = array<i32>} : memref<1x512x128xf32, #tpu.memory_space<vmem>>, vector<1x512x128xf32>,
    return
  }
  func.func @transform_0(%arg0: i32, %arg1: i32) -> (i32, i32, i32) {
    %c0_i32 = arith.constant 0 : i32
    %c0_i32_0 = arith.constant 0 : i32
    return %arg0, %arg1, %c0_i32 : i32, i32, i32
  }
  func.func @transform_1(%arg0: i32, %arg1: i32) -> (i32, i32) {
    %c0_i32 = arith.constant 0 : i32
    %c0_i32_0 = arith.constant 0 : i32
    %c0_i32_1 = arith.constant 0 : i32
    return %c0_i32, %c0_i32_0 : i32, i32
  }
  func.func @transform_2(%arg0: i32, %arg1: i32) -> (i32, i32) {
    %c0_i32 = arith.constant 0 : i32
    %c0_i32_0 = arith.constant 0 : i32
    %c0_i32_1 = arith.constant 0 : i32
    return %c0_i32, %c0_i32_0 : i32, i32
  }
  func.func @transform_3(%arg0: i32, %arg1: i32) -> (i32, i32, i32) {
    %c0_i32 = arith.constant 0 : i32
    %c0_i32_0 = arith.constant 0 : i32
    return %arg0, %arg1, %c0_i32 : i32, i32, i32
  }
}

</mosaic_0001>

<llo_original>
// kernel: cbr_forward.3
$region0: #{cbr_forward.3}
  #allocation0 [shape = 'u32[]', space=smem, size = 0x4, offset = 0x4, fixed_abs, tag = 'smem constant byte address 0x4 - core index']
  #allocation1 [shape = 'u32[72,128]{1,0:T(1,128)}', space=vmem, size = 0x9000, scoped, tag = 'internal scratch']
  %s0 = inlined_call_operand.vmem [shape: f32[2,1024,128], index: 0, kind: input, shape index: {}, may-alias: {0,3}]
  %s1 = inlined_call_operand.vmem [shape: f32[1,128], index: 1, kind: input, shape index: {}]
  %s2 = inlined_call_operand.vmem [shape: f32[1,128], index: 2, kind: input, shape index: {}]
  %s3 = inlined_call_operand.vmem [shape: f32[2,1024,128], index: 3, kind: output, shape index: {}, may-alias: {0,3}]
  %s4 = sld [smem:[#allocation0]]
  $region45: #{cbr_forward.3} parent=0
    _
  %s6 = ssub.s32 1, %s4
  %s7 = scalar_select 0, %s6, %s4
  loop: start=0, step=1, limit=6
  $region2: #{cbr_forward.3} parent=0 // loop_pre_header
    _
  $region3: #{cbr_forward.3} parent=0 // loop_header
    %s9 = sphi 0, %s13
    %p10 = scmp.ge.s32.totalorder %s9, 6
    %s16 = sphi 0, %s28
    %s17 = sphi 0, %s24
    %s18 = sphi 0, %s16
    %s19 = sphi 0, %s17
    %s20 = sphi 0, %s18
    %s21 = sphi 0, %s19
    %s33 = sphi 0, %s35
    %s36 = sphi 0, %s33
    %s37 = sphi 0, %s36
    %s53 = sphi 0, %s37
    %s57 = sphi 0, %s57
    %s59 = sphi 0, %s57
    %s60 = sphi 0, %s59
    %s74 = sphi 0, %s60
    %s78 = sphi 0, %s78
    %s80 = sphi 0, %s78
    %s81 = sphi 0, %s80
    %s95 = sphi 0, %s81
    %s103 = sphi 0, %s105
    %s106 = sphi 0, %s103
    %s107 = sphi 0, %s106
    %s123 = sphi 0, %s107
  $region4: #{cbr_forward.3} parent=0 // loop_header_branch
    %12 = sbr.rel (%p10) target = $region8
  $region5: #{cbr_forward.3} parent=0 // loop_body
    %s14 = ssub.s32 %s9, 1
    %s15 = ssub.s32 %s9, 2
    %s22 = sadd.s32 1, %s17
    %p23 = scmp.ge.s32.totalorder %s22, 2
    %s24 = scalar_select %p23, 0, %s22
    %s25 = sadd.s32 1, %s16
    %s26 = scalar_select %p23, %s25, %s16
    %p27 = scmp.ge.s32.totalorder %s26, 2
    %s28 = scalar_select %p27, 0, %s26
    %s29 = ssub.s32 %s16, %s28
    %s30 = ssub.s32 %s17, %s24
    %s31 = sor.u32 %s29, %s30
    %p32 = scmp.eq.s32.totalorder %s31, 0
    %s34 = sadd.s32 %s33, 1
    %s35 = scalar_select %p32, %s33, %s34
    %p38 = pneg %p32
    %p39 = scmp.eq.s32.totalorder %s9, 3
    %p40 = por %p38, %p39
    %p41 = scmp.ne.s32.totalorder %s33, %s36
    %p42 = scmp.eq.s32.totalorder %s9, 0
    %p43 = por %p41, %p42
    %p44 = scmp.ne.s32.totalorder %s33, %s36
    %p45 = scmp.eq.s32.totalorder %s14, 3
    %p46 = por %p44, %p45
    %p47 = scmp.ne.s32.totalorder %s36, %s37
    %p48 = scmp.eq.s32.totalorder %s14, 0
    %p49 = por %p47, %p48
    %p50 = scmp.ne.s32.totalorder %s36, %s37
    %p51 = scmp.eq.s32.totalorder %s15, 3
    %p52 = por %p50, %p51
    %p54 = scmp.ne.s32.totalorder %s37, %s53
    %p55 = scmp.eq.s32.totalorder %s15, 0
    %p56 = por %p54, %p55
    %s58 = sadd.s32 %s57, 1
    %p61 = scmp.eq.s32.totalorder %s9, 3
    %p62 = scmp.ne.s32.totalorder %s57, %s59
    %p63 = scmp.eq.s32.totalorder %s9, 0
    %p64 = por %p62, %p63
    %p65 = scmp.ne.s32.totalorder %s57, %s59
    %p66 = scmp.eq.s32.totalorder %s14, 3
    %p67 = por %p65, %p66
    %p68 = scmp.ne.s32.totalorder %s59, %s60
    %p69 = scmp.eq.s32.totalorder %s14, 0
    %p70 = por %p68, %p69
    %p71 = scmp.ne.s32.totalorder %s59, %s60
    %p72 = scmp.eq.s32.totalorder %s15, 3
    %p73 = por %p71, %p72
    %p75 = scmp.ne.s32.totalorder %s60, %s74
    %p76 = scmp.eq.s32.totalorder %s15, 0
    %p77 = por %p75, %p76
    %s79 = sadd.s32 %s78, 1
    %p82 = scmp.eq.s32.totalorder %s9, 3
    %p83 = scmp.ne.s32.totalorder %s78, %s80
    %p84 = scmp.eq.s32.totalorder %s9, 0
    %p85 = por %p83, %p84
    %p86 = scmp.ne.s32.totalorder %s78, %s80
    %p87 = scmp.eq.s32.totalorder %s14, 3
    %p88 = por %p86, %p87
    %p89 = scmp.ne.s32.totalorder %s80, %s81
    %p90 = scmp.eq.s32.totalorder %s14, 0
    %p91 = por %p89, %p90
    %p92 = scmp.ne.s32.totalorder %s80, %s81
    %p93 = scmp.eq.s32.totalorder %s15, 3
    %p94 = por %p92, %p93
    %p96 = scmp.ne.s32.totalorder %s81, %s95
    %p97 = scmp.eq.s32.totalorder %s15, 0
    %p98 = por %p96, %p97
    %s99 = ssub.s32 %s16, %s28
    %s100 = ssub.s32 %s17, %s24
    %s101 = sor.u32 %s99, %s100
    %p102 = scmp.eq.s32.totalorder %s101, 0
    %s104 = sadd.s32 %s103, 1
    %s105 = scalar_select %p102, %s103, %s104
    %p108 = pneg %p102
    %p109 = scmp.eq.s32.totalorder %s9, 3
    %p110 = por %p108, %p109
    %p111 = scmp.ne.s32.totalorder %s103, %s106
    %p112 = scmp.eq.s32.totalorder %s9, 0
    %p113 = por %p111, %p112
    %p114 = scmp.ne.s32.totalorder %s103, %s106
    %p115 = scmp.eq.s32.totalorder %s14, 3
    %p116 = por %p114, %p115
    %p117 = scmp.ne.s32.totalorder %s106, %s107
    %p118 = scmp.eq.s32.totalorder %s14, 0
    %p119 = por %p117, %p118
    %p120 = scmp.ne.s32.totalorder %s106, %s107
    %p121 = scmp.eq.s32.totalorder %s15, 3
    %p122 = por %p120, %p121
    %p124 = scmp.ne.s32.totalorder %s107, %s123
    %p125 = scmp.eq.s32.totalorder %s15, 0
    %p126 = por %p124, %p125
    %p127 = scmp.le.s32.totalorder 1, %s9
    %p128 = scmp.lt.s32.totalorder %s9, 5
    %p129 = pnand %p127, %p128
    %p130 = pneg %p129
    // Predicated region
    $region9: #{cbr_forward.3} parent=5 // pred_check
      _
    $region10: #{cbr_forward.3} parent=5 // pred_check_branch
      %132 = sbr.rel (%p129) target = $region12
    $region11: #{cbr_forward.3} parent=5 // pred_region
      %s133 = ssub.s32 %s9, 1
      // Predicated region
      $region13: #{cbr_forward.3} parent=11 // pred_check
        %p134 = pneg %p70
      $region14: #{cbr_forward.3} parent=11 // pred_check_branch
        %136 = sbr.rel (%p134) target = $region16
      $region15: #{cbr_forward.3} parent=11 // pred_region
        _
      $region16: #{cbr_forward.3} parent=11 // pred_fallthru
        _
      // Predicated region
      $region17: #{cbr_forward.3} parent=11 // pred_check
        %p137 = pneg %p91
      $region18: #{cbr_forward.3} parent=11 // pred_check_branch
        %139 = sbr.rel (%p137) target = $region20
      $region19: #{cbr_forward.3} parent=11 // pred_region
        _
      $region20: #{cbr_forward.3} parent=11 // pred_fallthru
        _
    $region12: #{cbr_forward.3} parent=5 // pred_fallthru
      _
    %p140 = scmp.lt.s32.totalorder %s9, 4
    // Predicated region
    $region21: #{cbr_forward.3} parent=5 // pred_check
      %p141 = pneg %p140
    $region22: #{cbr_forward.3} parent=5 // pred_check_branch
      %143 = sbr.rel (%p141) target = $region24
    $region23: #{cbr_forward.3} parent=5 // pred_region
      // Predicated region
      $region25: #{cbr_forward.3} parent=23 // pred_check
        %p144 = pneg %p43
      $region26: #{cbr_forward.3} parent=23 // pred_check_branch
        %146 = sbr.rel (%p144) target = $region28
      $region27: #{cbr_forward.3} parent=23 // pred_region
        %s147 = smul.u32 64, %s17
        %p148 = scmp.lt.s32.totalorder %s16, 1
        %s149 = scalar_select %p148, %s16, 1
        %p150 = scmp.lt.s32.totalorder %s147, 127
        %s151 = scalar_select %p150, %s147, 127
        %s152 = smul.addr %s149, 128
        %s153 = sadd.s32 %s151, %s152
        %s154 = smul.addr %s153, 8
        %s155 = scalar_lea.vmem %s0, %s154
        %s156 = smul.u32 64, %s17
      $region28: #{cbr_forward.3} parent=23 // pred_fallthru
        _
    $region24: #{cbr_forward.3} parent=5 // pred_fallthru
      _
    %p157 = scmp.le.s32.totalorder 1, %s9
    %p158 = scmp.lt.s32.totalorder %s9, 5
    %p159 = pnand %p157, %p158
    %p160 = pneg %p159
    // Predicated region
    $region29: #{cbr_forward.3} parent=5 // pred_check
      _
    $region30: #{cbr_forward.3} parent=5 // pred_check_branch
      %162 = sbr.rel (%p159) target = $region32
    $region31: #{cbr_forward.3} parent=5 // pred_region
      %s163 = ssub.s32 %s9, 1
      %s164 = smul.u32 64, %s19
      %p165 = scmp.lt.s32.totalorder %s18, 1
      %s166 = scalar_select %p165, %s18, 1
      %p167 = scmp.lt.s32.totalorder %s164, 127
      %s168 = scalar_select %p167, %s164, 127
      %s169 = smul.addr %s166, 128
      %s170 = sadd.s32 %s168, %s169
      %s171 = smul.addr %s170, 8
      %s172 = scalar_lea.vmem %s0, %s171
      %p173 = pneg %p49
      %p174 = pneg %p46
      %p175 = pneg %p70
      %p176 = pneg %p67
      %p177 = pneg %p91
      %p178 = pneg %p88
      %p179 = pneg %p119
      %p180 = pneg %p116
      %s181 = smul.u32 64, %s19
      %p182 = scmp.lt.s32.totalorder %s18, 1
      %s183 = scalar_select %p182, %s18, 1
      %p184 = scmp.lt.s32.totalorder %s181, 127
      %s185 = scalar_select %p184, %s181, 127
      %s186 = smul.addr %s183, 128
      %s187 = sadd.s32 %s185, %s186
      %s188 = smul.addr %s187, 8
      %s189 = scalar_lea.vmem %s3, %s188
      %s190 = smul.u32 64, %s19
      %p191 = scmp.lt.s32.totalorder %s18, 1
      %s192 = scalar_select %p191, %s18, 1
      %p193 = scmp.lt.s32.totalorder %s190, 127
      %s194 = scalar_select %p193, %s190, 127
      %s195 = smul.addr %s192, 128
      %s196 = sadd.s32 %s194, %s195
      %s197 = smul.addr %s196, 8
      %s198 = scalar_lea.vmem %s0, %s197
      %s199 = smul.u32 64, %s19
      %s200 = smul.u32 64, %s19
      %p201 = scmp.lt.s32.totalorder %s18, 1
      %s202 = scalar_select %p201, %s18, 1
      %p203 = scmp.lt.s32.totalorder %s200, 127
      %s204 = scalar_select %p203, %s200, 127
      %s205 = smul.addr %s202, 128
      %s206 = sadd.s32 %s204, %s205
      %s207 = smul.addr %s206, 8
      %s208 = scalar_lea.vmem %s3, %s207
      %s209 = smul.u32 64, %s19
      %v210 = vld [vmem:[%s198] sm:$0xff]
      %v211 = vld [vmem:[%s198 + $0x8] sm:$0xff]
      %v212 = vld [vmem:[%s198 + $0x10] sm:$0xff]
      %v213 = vld [vmem:[%s198 + $0x18] sm:$0xff]
      %v214 = vld [vmem:[%s198 + $0x20] sm:$0xff]
      %v215 = vld [vmem:[%s198 + $0x28] sm:$0xff]
      %v216 = vld [vmem:[%s198 + $0x30] sm:$0xff]
      %v217 = vld [vmem:[%s198 + $0x38] sm:$0xff]
      %v218 = vld [vmem:[%s198 + $0x40] sm:$0xff]
      %v219 = vld [vmem:[%s198 + $0x48] sm:$0xff]
      %v220 = vld [vmem:[%s198 + $0x50] sm:$0xff]
      %v221 = vld [vmem:[%s198 + $0x58] sm:$0xff]
      %v222 = vld [vmem:[%s198 + $0x60] sm:$0xff]
      %v223 = vld [vmem:[%s198 + $0x68] sm:$0xff]
      %v224 = vld [vmem:[%s198 + $0x70] sm:$0xff]
      %v225 = vld [vmem:[%s198 + $0x78] sm:$0xff]
      %v226 = vld [vmem:[%s198 + $0x80] sm:$0xff]
      %v227 = vld [vmem:[%s198 + $0x88] sm:$0xff]
      %v228 = vld [vmem:[%s198 + $0x90] sm:$0xff]
      %v229 = vld [vmem:[%s198 + $0x98] sm:$0xff]
      %v230 = vld [vmem:[%s198 + $0xa0] sm:$0xff]
      %v231 = vld [vmem:[%s198 + $0xa8] sm:$0xff]
      %v232 = vld [vmem:[%s198 + $0xb0] sm:$0xff]
      %v233 = vld [vmem:[%s198 + $0xb8] sm:$0xff]
      %v234 = vld [vmem:[%s198 + $0xc0] sm:$0xff]
      %v235 = vld [vmem:[%s198 + $0xc8] sm:$0xff]
      %v236 = vld [vmem:[%s198 + $0xd0] sm:$0xff]
      %v237 = vld [vmem:[%s198 + $0xd8] sm:$0xff]
      %v238 = vld [vmem:[%s198 + $0xe0] sm:$0xff]
      %v239 = vld [vmem:[%s198 + $0xe8] sm:$0xff]
      %v240 = vld [vmem:[%s198 + $0xf0] sm:$0xff]
      %v241 = vld [vmem:[%s198 + $0xf8] sm:$0xff]
      %v242 = vld [vmem:[%s198 + $0x100] sm:$0xff]
      %v243 = vld [vmem:[%s198 + $0x108] sm:$0xff]
      %v244 = vld [vmem:[%s198 + $0x110] sm:$0xff]
      %v245 = vld [vmem:[%s198 + $0x118] sm:$0xff]
      %v246 = vld [vmem:[%s198 + $0x120] sm:$0xff]
      %v247 = vld [vmem:[%s198 + $0x128] sm:$0xff]
      %v248 = vld [vmem:[%s198 + $0x130] sm:$0xff]
      %v249 = vld [vmem:[%s198 + $0x138] sm:$0xff]
      %v250 = vld [vmem:[%s198 + $0x140] sm:$0xff]
      %v251 = vld [vmem:[%s198 + $0x148] sm:$0xff]
      %v252 = vld [vmem:[%s198 + $0x150] sm:$0xff]
      %v253 = vld [vmem:[%s198 + $0x158] sm:$0xff]
      %v254 = vld [vmem:[%s198 + $0x160] sm:$0xff]
      %v255 = vld [vmem:[%s198 + $0x168] sm:$0xff]
      %v256 = vld [vmem:[%s198 + $0x170] sm:$0xff]
      %v257 = vld [vmem:[%s198 + $0x178] sm:$0xff]
      %v258 = vld [vmem:[%s198 + $0x180] sm:$0xff]
      %v259 = vld [vmem:[%s198 + $0x188] sm:$0xff]
      %v260 = vld [vmem:[%s198 + $0x190] sm:$0xff]
      %v261 = vld [vmem:[%s198 + $0x198] sm:$0xff]
      %v262 = vld [vmem:[%s198 + $0x1a0] sm:$0xff]
      %v263 = vld [vmem:[%s198 + $0x1a8] sm:$0xff]
      %v264 = vld [vmem:[%s198 + $0x1b0] sm:$0xff]
      %v265 = vld [vmem:[%s198 + $0x1b8] sm:$0xff]
      %v266 = vld [vmem:[%s198 + $0x1c0] sm:$0xff]
      %v267 = vld [vmem:[%s198 + $0x1c8] sm:$0xff]
      %v268 = vld [vmem:[%s198 + $0x1d0] sm:$0xff]
      %v269 = vld [vmem:[%s198 + $0x1d8] sm:$0xff]
      %v270 = vld [vmem:[%s198 + $0x1e0] sm:$0xff]
      %v271 = vld [vmem:[%s198 + $0x1e8] sm:$0xff]
      %v272 = vld [vmem:[%s198 + $0x1f0] sm:$0xff]
      %v273 = vld [vmem:[%s198 + $0x1f8] sm:$0xff]
      %v274 = vld [vmem:[%s1] sm:$0x1]
      %v276 = vperm.slane %v274, 0
      %v278 = vmul.f32 %v210, %v276
      %v279 = vmul.f32 %v211, %v276
      %v280 = vmul.f32 %v212, %v276
      %v281 = vmul.f32 %v213, %v276
      %v282 = vmul.f32 %v214, %v276
      %v283 = vmul.f32 %v215, %v276
      %v284 = vmul.f32 %v216, %v276
      %v285 = vmul.f32 %v217, %v276
      %v286 = vmul.f32 %v218, %v276
      %v287 = vmul.f32 %v219, %v276
      %v288 = vmul.f32 %v220, %v276
      %v289 = vmul.f32 %v221, %v276
      %v290 = vmul.f32 %v222, %v276
      %v291 = vmul.f32 %v223, %v276
      %v292 = vmul.f32 %v224, %v276
      %v293 = vmul.f32 %v225, %v276
      %v294 = vmul.f32 %v226, %v276
      %v295 = vmul.f32 %v227, %v276
      %v296 = vmul.f32 %v228, %v276
      %v297 = vmul.f32 %v229, %v276
      %v298 = vmul.f32 %v230, %v276
      %v299 = vmul.f32 %v231, %v276
      %v300 = vmul.f32 %v232, %v276
      %v301 = vmul.f32 %v233, %v276
      %v302 = vmul.f32 %v234, %v276
      %v303 = vmul.f32 %v235, %v276
      %v304 = vmul.f32 %v236, %v276
      %v305 = vmul.f32 %v237, %v276
      %v306 = vmul.f32 %v238, %v276
      %v307 = vmul.f32 %v239, %v276
      %v308 = vmul.f32 %v240, %v276
      %v309 = vmul.f32 %v241, %v276
      %v310 = vmul.f32 %v242, %v276
      %v311 = vmul.f32 %v243, %v276
      %v312 = vmul.f32 %v244, %v276
      %v313 = vmul.f32 %v245, %v276
      %v314 = vmul.f32 %v246, %v276
      %v315 = vmul.f32 %v247, %v276
      %v316 = vmul.f32 %v248, %v276
      %v317 = vmul.f32 %v249, %v276
      %v318 = vmul.f32 %v250, %v276
      %v319 = vmul.f32 %v251, %v276
      %v320 = vmul.f32 %v252, %v276
      %v321 = vmul.f32 %v253, %v276
      %v322 = vmul.f32 %v254, %v276
      %v323 = vmul.f32 %v255, %v276
      %v324 = vmul.f32 %v256, %v276
      %v325 = vmul.f32 %v257, %v276
      %v326 = vmul.f32 %v258, %v276
      %v327 = vmul.f32 %v259, %v276
      %v328 = vmul.f32 %v260, %v276
      %v329 = vmul.f32 %v261, %v276
      %v330 = vmul.f32 %v262, %v276
      %v331 = vmul.f32 %v263, %v276
      %v332 = vmul.f32 %v264, %v276
      %v333 = vmul.f32 %v265, %v276
      %v334 = vmul.f32 %v266, %v276
      %v335 = vmul.f32 %v267, %v276
      %v336 = vmul.f32 %v268, %v276
      %v337 = vmul.f32 %v269, %v276
      %v338 = vmul.f32 %v270, %v276
      %v339 = vmul.f32 %v271, %v276
      %v340 = vmul.f32 %v272, %v276
      %v341 = vmul.f32 %v273, %v276
      %v342 = vld [vmem:[%s2] sm:$0x1]
      %v344 = vperm.slane %v342, 0
      %v346 = vadd.f32 %v278, %v344
      %v347 = vadd.f32 %v279, %v344
      %v348 = vadd.f32 %v280, %v344
      %v349 = vadd.f32 %v281, %v344
      %v350 = vadd.f32 %v282, %v344
      %v351 = vadd.f32 %v283, %v344
      %v352 = vadd.f32 %v284, %v344
      %v353 = vadd.f32 %v285, %v344
      %v354 = vadd.f32 %v286, %v344
      %v355 = vadd.f32 %v287, %v344
      %v356 = vadd.f32 %v288, %v344
      %v357 = vadd.f32 %v289, %v344
      %v358 = vadd.f32 %v290, %v344
      %v359 = vadd.f32 %v291, %v344
      %v360 = vadd.f32 %v292, %v344
      %v361 = vadd.f32 %v293, %v344
      %v362 = vadd.f32 %v294, %v344
      %v363 = vadd.f32 %v295, %v344
      %v364 = vadd.f32 %v296, %v344
      %v365 = vadd.f32 %v297, %v344
      %v366 = vadd.f32 %v298, %v344
      %v367 = vadd.f32 %v299, %v344
      %v368 = vadd.f32 %v300, %v344
      %v369 = vadd.f32 %v301, %v344
      %v370 = vadd.f32 %v302, %v344
      %v371 = vadd.f32 %v303, %v344
      %v372 = vadd.f32 %v304, %v344
      %v373 = vadd.f32 %v305, %v344
      %v374 = vadd.f32 %v306, %v344
      %v375 = vadd.f32 %v307, %v344
      %v376 = vadd.f32 %v308, %v344
      %v377 = vadd.f32 %v309, %v344
      %v378 = vadd.f32 %v310, %v344
      %v379 = vadd.f32 %v311, %v344
      %v380 = vadd.f32 %v312, %v344
      %v381 = vadd.f32 %v313, %v344
      %v382 = vadd.f32 %v314, %v344
      %v383 = vadd.f32 %v315, %v344
      %v384 = vadd.f32 %v316, %v344
      %v385 = vadd.f32 %v317, %v344
      %v386 = vadd.f32 %v318, %v344
      %v387 = vadd.f32 %v319, %v344
      %v388 = vadd.f32 %v320, %v344
      %v389 = vadd.f32 %v321, %v344
      %v390 = vadd.f32 %v322, %v344
      %v391 = vadd.f32 %v323, %v344
      %v392 = vadd.f32 %v324, %v344
      %v393 = vadd.f32 %v325, %v344
      %v394 = vadd.f32 %v326, %v344
      %v395 = vadd.f32 %v327, %v344
      %v396 = vadd.f32 %v328, %v344
      %v397 = vadd.f32 %v329, %v344
      %v398 = vadd.f32 %v330, %v344
      %v399 = vadd.f32 %v331, %v344
      %v400 = vadd.f32 %v332, %v344
      %v401 = vadd.f32 %v333, %v344
      %v402 = vadd.f32 %v334, %v344
      %v403 = vadd.f32 %v335, %v344
      %v404 = vadd.f32 %v336, %v344
      %v405 = vadd.f32 %v337, %v344
      %v406 = vadd.f32 %v338, %v344
      %v407 = vadd.f32 %v339, %v344
      %v408 = vadd.f32 %v340, %v344
      %v409 = vadd.f32 %v341, %v344
      %v410 = vmax.f32 %v346, 0.0
      %v411 = vmax.f32 %v347, 0.0
      %v412 = vmax.f32 %v348, 0.0
      %v413 = vmax.f32 %v349, 0.0
      %v414 = vmax.f32 %v350, 0.0
      %v415 = vmax.f32 %v351, 0.0
      %v416 = vmax.f32 %v352, 0.0
      %v417 = vmax.f32 %v353, 0.0
      %v418 = vmax.f32 %v354, 0.0
      %v419 = vmax.f32 %v355, 0.0
      %v420 = vmax.f32 %v356, 0.0
      %v421 = vmax.f32 %v357, 0.0
      %v422 = vmax.f32 %v358, 0.0
      %v423 = vmax.f32 %v359, 0.0
      %v424 = vmax.f32 %v360, 0.0
      %v425 = vmax.f32 %v361, 0.0
      %v426 = vmax.f32 %v362, 0.0
      %v427 = vmax.f32 %v363, 0.0
      %v428 = vmax.f32 %v364, 0.0
      %v429 = vmax.f32 %v365, 0.0
      %v430 = vmax.f32 %v366, 0.0
      %v431 = vmax.f32 %v367, 0.0
      %v432 = vmax.f32 %v368, 0.0
      %v433 = vmax.f32 %v369, 0.0
      %v434 = vmax.f32 %v370, 0.0
      %v435 = vmax.f32 %v371, 0.0
      %v436 = vmax.f32 %v372, 0.0
      %v437 = vmax.f32 %v373, 0.0
      %v438 = vmax.f32 %v374, 0.0
      %v439 = vmax.f32 %v375, 0.0
      %v440 = vmax.f32 %v376, 0.0
      %v441 = vmax.f32 %v377, 0.0
      %v442 = vmax.f32 %v378, 0.0
      %v443 = vmax.f32 %v379, 0.0
      %v444 = vmax.f32 %v380, 0.0
      %v445 = vmax.f32 %v381, 0.0
      %v446 = vmax.f32 %v382, 0.0
      %v447 = vmax.f32 %v383, 0.0
      %v448 = vmax.f32 %v384, 0.0
      %v449 = vmax.f32 %v385, 0.0
      %v450 = vmax.f32 %v386, 0.0
      %v451 = vmax.f32 %v387, 0.0
      %v452 = vmax.f32 %v388, 0.0
      %v453 = vmax.f32 %v389, 0.0
      %v454 = vmax.f32 %v390, 0.0
      %v455 = vmax.f32 %v391, 0.0
      %v456 = vmax.f32 %v392, 0.0
      %v457 = vmax.f32 %v393, 0.0
      %v458 = vmax.f32 %v394, 0.0
      %v459 = vmax.f32 %v395, 0.0
      %v460 = vmax.f32 %v396, 0.0
      %v461 = vmax.f32 %v397, 0.0
      %v462 = vmax.f32 %v398, 0.0
      %v463 = vmax.f32 %v399, 0.0
      %v464 = vmax.f32 %v400, 0.0
      %v465 = vmax.f32 %v401, 0.0
      %v466 = vmax.f32 %v402, 0.0
      %v467 = vmax.f32 %v403, 0.0
      %v468 = vmax.f32 %v404, 0.0
      %v469 = vmax.f32 %v405, 0.0
      %v470 = vmax.f32 %v406, 0.0
      %v471 = vmax.f32 %v407, 0.0
      %v472 = vmax.f32 %v408, 0.0
      %v473 = vmax.f32 %v409, 0.0
      %474 = vst [vmem:[%s208] sm:$0xff] %v410
      %475 = vst [vmem:[%s208 + $0x8] sm:$0xff] %v411
      %476 = vst [vmem:[%s208 + $0x10] sm:$0xff] %v412
      %477 = vst [vmem:[%s208 + $0x18] sm:$0xff] %v413
      %478 = vst [vmem:[%s208 + $0x20] sm:$0xff] %v414
      %479 = vst [vmem:[%s208 + $0x28] sm:$0xff] %v415
      %480 = vst [vmem:[%s208 + $0x30] sm:$0xff] %v416
      %481 = vst [vmem:[%s208 + $0x38] sm:$0xff] %v417
      %482 = vst [vmem:[%s208 + $0x40] sm:$0xff] %v418
      %483 = vst [vmem:[%s208 + $0x48] sm:$0xff] %v419
      %484 = vst [vmem:[%s208 + $0x50] sm:$0xff] %v420
      %485 = vst [vmem:[%s208 + $0x58] sm:$0xff] %v421
      %486 = vst [vmem:[%s208 + $0x60] sm:$0xff] %v422
      %487 = vst [vmem:[%s208 + $0x68] sm:$0xff] %v423
      %488 = vst [vmem:[%s208 + $0x70] sm:$0xff] %v424
      %489 = vst [vmem:[%s208 + $0x78] sm:$0xff] %v425
      %490 = vst [vmem:[%s208 + $0x80] sm:$0xff] %v426
      %491 = vst [vmem:[%s208 + $0x88] sm:$0xff] %v427
      %492 = vst [vmem:[%s208 + $0x90] sm:$0xff] %v428
      %493 = vst [vmem:[%s208 + $0x98] sm:$0xff] %v429
      %494 = vst [vmem:[%s208 + $0xa0] sm:$0xff] %v430
      %495 = vst [vmem:[%s208 + $0xa8] sm:$0xff] %v431
      %496 = vst [vmem:[%s208 + $0xb0] sm:$0xff] %v432
      %497 = vst [vmem:[%s208 + $0xb8] sm:$0xff] %v433
      %498 = vst [vmem:[%s208 + $0xc0] sm:$0xff] %v434
      %499 = vst [vmem:[%s208 + $0xc8] sm:$0xff] %v435
      %500 = vst [vmem:[%s208 + $0xd0] sm:$0xff] %v436
      %501 = vst [vmem:[%s208 + $0xd8] sm:$0xff] %v437
      %502 = vst [vmem:[%s208 + $0xe0] sm:$0xff] %v438
      %503 = vst [vmem:[%s208 + $0xe8] sm:$0xff] %v439
      %504 = vst [vmem:[%s208 + $0xf0] sm:$0xff] %v440
      %505 = vst [vmem:[%s208 + $0xf8] sm:$0xff] %v441
      %506 = vst [vmem:[%s208 + $0x100] sm:$0xff] %v442
      %507 = vst [vmem:[%s208 + $0x108] sm:$0xff] %v443
      %508 = vst [vmem:[%s208 + $0x110] sm:$0xff] %v444
      %509 = vst [vmem:[%s208 + $0x118] sm:$0xff] %v445
      %510 = vst [vmem:[%s208 + $0x120] sm:$0xff] %v446
      %511 = vst [vmem:[%s208 + $0x128] sm:$0xff] %v447
      %512 = vst [vmem:[%s208 + $0x130] sm:$0xff] %v448
      %513 = vst [vmem:[%s208 + $0x138] sm:$0xff] %v449
      %514 = vst [vmem:[%s208 + $0x140] sm:$0xff] %v450
      %515 = vst [vmem:[%s208 + $0x148] sm:$0xff] %v451
      %516 = vst [vmem:[%s208 + $0x150] sm:$0xff] %v452
      %517 = vst [vmem:[%s208 + $0x158] sm:$0xff] %v453
      %518 = vst [vmem:[%s208 + $0x160] sm:$0xff] %v454
      %519 = vst [vmem:[%s208 + $0x168] sm:$0xff] %v455
      %520 = vst [vmem:[%s208 + $0x170] sm:$0xff] %v456
      %521 = vst [vmem:[%s208 + $0x178] sm:$0xff] %v457
      %522 = vst [vmem:[%s208 + $0x180] sm:$0xff] %v458
      %523 = vst [vmem:[%s208 + $0x188] sm:$0xff] %v459
      %524 = vst [vmem:[%s208 + $0x190] sm:$0xff] %v460
      %525 = vst [vmem:[%s208 + $0x198] sm:$0xff] %v461
      %526 = vst [vmem:[%s208 + $0x1a0] sm:$0xff] %v462
      %527 = vst [vmem:[%s208 + $0x1a8] sm:$0xff] %v463
      %528 = vst [vmem:[%s208 + $0x1b0] sm:$0xff] %v464
      %529 = vst [vmem:[%s208 + $0x1b8] sm:$0xff] %v465
      %530 = vst [vmem:[%s208 + $0x1c0] sm:$0xff] %v466
      %531 = vst [vmem:[%s208 + $0x1c8] sm:$0xff] %v467
      %532 = vst [vmem:[%s208 + $0x1d0] sm:$0xff] %v468
      %533 = vst [vmem:[%s208 + $0x1d8] sm:$0xff] %v469
      %534 = vst [vmem:[%s208 + $0x1e0] sm:$0xff] %v470
      %535 = vst [vmem:[%s208 + $0x1e8] sm:$0xff] %v471
      %536 = vst [vmem:[%s208 + $0x1f0] sm:$0xff] %v472
      %537 = vst [vmem:[%s208 + $0x1f8] sm:$0xff] %v473
      %s538 = smul.u32 64, %s19
      %p539 = scmp.lt.s32.totalorder %s18, 1
      %s540 = scalar_select %p539, %s18, 1
      %p541 = scmp.lt.s32.totalorder %s538, 127
      %s542 = scalar_select %p541, %s538, 127
      %s543 = smul.addr %s540, 128
      %s544 = sadd.s32 %s542, %s543
      %s545 = smul.addr %s544, 8
      %s546 = scalar_lea.vmem %s3, %s545
      // Predicated region
      $region33: #{cbr_forward.3} parent=31 // pred_check
        %p547 = pneg %p116
      $region34: #{cbr_forward.3} parent=31 // pred_check_branch
        %549 = sbr.rel (%p547) target = $region36
      $region35: #{cbr_forward.3} parent=31 // pred_region
        %s550 = smul.u32 64, %s19
      $region36: #{cbr_forward.3} parent=31 // pred_fallthru
        _
    $region32: #{cbr_forward.3} parent=5 // pred_fallthru
      _
    %p551 = scmp.le.s32.totalorder 2, %s9
    // Predicated region
    $region37: #{cbr_forward.3} parent=5 // pred_check
      %p552 = pneg %p551
    $region38: #{cbr_forward.3} parent=5 // pred_check_branch
      %554 = sbr.rel (%p552) target = $region40
    $region39: #{cbr_forward.3} parent=5 // pred_region
      %s555 = ssub.s32 %s9, 2
      // Predicated region
      $region41: #{cbr_forward.3} parent=39 // pred_check
        %p556 = pneg %p122
      $region42: #{cbr_forward.3} parent=39 // pred_check_branch
        %558 = sbr.rel (%p556) target = $region44
      $region43: #{cbr_forward.3} parent=39 // pred_region
        %s559 = smul.u32 64, %s21
        %p560 = scmp.lt.s32.totalorder %s20, 1
        %s561 = scalar_select %p560, %s20, 1
        %p562 = scmp.lt.s32.totalorder %s559, 127
        %s563 = scalar_select %p562, %s559, 127
        %s564 = smul.addr %s561, 128
        %s565 = sadd.s32 %s563, %s564
        %s566 = smul.addr %s565, 8
        %s567 = scalar_lea.vmem %s3, %s566
      $region44: #{cbr_forward.3} parent=39 // pred_fallthru
        _
    $region40: #{cbr_forward.3} parent=5 // pred_fallthru
      _
  $region6: #{cbr_forward.3} parent=0 // loop_footer
    %s13 = sadd.s32 1, %s9
  $region7: #{cbr_forward.3} parent=0 // loop_footer_branch
    %8 = sbr.rel target = $region3
  $region8: #{cbr_forward.3} parent=0 // loop_exit
    _

// kernel: cbr_forward.2
$region0: #{cbr_forward.2}
  #allocation0 [shape = 'u32[]', space=smem, size = 0x4, offset = 0x4, fixed_abs, tag = 'smem constant byte address 0x4 - core index']
  #allocation1 [shape = 'u32[72,128]{1,0:T(1,128)}', space=vmem, size = 0x9000, scoped, tag = 'internal scratch']
  %s0 = inlined_call_operand.vmem [shape: bf16[2,1024,128], index: 0, kind: input, shape index: {}]
  %s1 = inlined_call_operand.vmem [shape: bf16[128,128], index: 1, kind: input, shape index: {}]
  %s2 = inlined_call_operand.vmem [shape: f32[2,1024,128], index: 2, kind: output, shape index: {0}]
  %s3 = inlined_call_operand.vmem [shape: f32[2,2,1,128], index: 3, kind: output, shape index: {1}]
  %s4 = inlined_call_operand.vmem [shape: f32[2,2,1,128], index: 4, kind: output, shape index: {2}]
  %5 = xla_tuple %s2, %s3, %s4
  %s6 = sld [smem:[#allocation0]]
  $region57: #{cbr_forward.2} parent=0
    _
  %s8 = ssub.s32 1, %s6
  %s9 = scalar_select 0, %s8, %s6
  loop: start=0, step=1, limit=6
  $region2: #{cbr_forward.2} parent=0 // loop_pre_header
    _
  $region3: #{cbr_forward.2} parent=0 // loop_header
    %s11 = sphi 0, %s15
    %p12 = scmp.ge.s32.totalorder %s11, 6
    %s18 = sphi 0, %s30
    %s19 = sphi 0, %s26
    %s20 = sphi 0, %s18
    %s21 = sphi 0, %s19
    %s22 = sphi 0, %s20
    %s23 = sphi 0, %s21
    %s35 = sphi 0, %s37
    %s38 = sphi 0, %s35
    %s39 = sphi 0, %s38
    %s55 = sphi 0, %s39
    %s59 = sphi 0, %s59
    %s61 = sphi 0, %s59
    %s62 = sphi 0, %s61
    %s76 = sphi 0, %s62
    %s84 = sphi 0, %s86
    %s87 = sphi 0, %s84
    %s88 = sphi 0, %s87
    %s104 = sphi 0, %s88
    %s112 = sphi 0, %s114
    %s115 = sphi 0, %s112
    %s116 = sphi 0, %s115
    %s132 = sphi 0, %s116
    %s140 = sphi 0, %s142
    %s143 = sphi 0, %s140
    %s144 = sphi 0, %s143
    %s160 = sphi 0, %s144
  $region4: #{cbr_forward.2} parent=0 // loop_header_branch
    %14 = sbr.rel (%p12) target = $region8
  $region5: #{cbr_forward.2} parent=0 // loop_body
    %s16 = ssub.s32 %s11, 1
    %s17 = ssub.s32 %s11, 2
    %s24 = sadd.s32 1, %s19
    %p25 = scmp.ge.s32.totalorder %s24, 2
    %s26 = scalar_select %p25, 0, %s24
    %s27 = sadd.s32 1, %s18
    %s28 = scalar_select %p25, %s27, %s18
    %p29 = scmp.ge.s32.totalorder %s28, 2
    %s30 = scalar_select %p29, 0, %s28
    %s31 = ssub.s32 %s18, %s30
    %s32 = ssub.s32 %s19, %s26
    %s33 = sor.u32 %s31, %s32
    %p34 = scmp.eq.s32.totalorder %s33, 0
    %s36 = sadd.s32 %s35, 1
    %s37 = scalar_select %p34, %s35, %s36
    %p40 = pneg %p34
    %p41 = scmp.eq.s32.totalorder %s11, 3
    %p42 = por %p40, %p41
    %p43 = scmp.ne.s32.totalorder %s35, %s38
    %p44 = scmp.eq.s32.totalorder %s11, 0
    %p45 = por %p43, %p44
    %p46 = scmp.ne.s32.totalorder %s35, %s38
    %p47 = scmp.eq.s32.totalorder %s16, 3
    %p48 = por %p46, %p47
    %p49 = scmp.ne.s32.totalorder %s38, %s39
    %p50 = scmp.eq.s32.totalorder %s16, 0
    %p51 = por %p49, %p50
    %p52 = scmp.ne.s32.totalorder %s38, %s39
    %p53 = scmp.eq.s32.totalorder %s17, 3
    %p54 = por %p52, %p53
    %p56 = scmp.ne.s32.totalorder %s39, %s55
    %p57 = scmp.eq.s32.totalorder %s17, 0
    %p58 = por %p56, %p57
    %s60 = sadd.s32 %s59, 1
    %p63 = scmp.eq.s32.totalorder %s11, 3
    %p64 = scmp.ne.s32.totalorder %s59, %s61
    %p65 = scmp.eq.s32.totalorder %s11, 0
    %p66 = por %p64, %p65
    %p67 = scmp.ne.s32.totalorder %s59, %s61
    %p68 = scmp.eq.s32.totalorder %s16, 3
    %p69 = por %p67, %p68
    %p70 = scmp.ne.s32.totalorder %s61, %s62
    %p71 = scmp.eq.s32.totalorder %s16, 0
    %p72 = por %p70, %p71
    %p73 = scmp.ne.s32.totalorder %s61, %s62
    %p74 = scmp.eq.s32.totalorder %s17, 3
    %p75 = por %p73, %p74
    %p77 = scmp.ne.s32.totalorder %s62, %s76
    %p78 = scmp.eq.s32.totalorder %s17, 0
    %p79 = por %p77, %p78
    %s80 = ssub.s32 %s18, %s30
    %s81 = ssub.s32 %s19, %s26
    %s82 = sor.u32 %s80, %s81
    %p83 = scmp.eq.s32.totalorder %s82, 0
    %s85 = sadd.s32 %s84, 1
    %s86 = scalar_select %p83, %s84, %s85
    %p89 = pneg %p83
    %p90 = scmp.eq.s32.totalorder %s11, 3
    %p91 = por %p89, %p90
    %p92 = scmp.ne.s32.totalorder %s84, %s87
    %p93 = scmp.eq.s32.totalorder %s11, 0
    %p94 = por %p92, %p93
    %p95 = scmp.ne.s32.totalorder %s84, %s87
    %p96 = scmp.eq.s32.totalorder %s16, 3
    %p97 = por %p95, %p96
    %p98 = scmp.ne.s32.totalorder %s87, %s88
    %p99 = scmp.eq.s32.totalorder %s16, 0
    %p100 = por %p98, %p99
    %p101 = scmp.ne.s32.totalorder %s87, %s88
    %p102 = scmp.eq.s32.totalorder %s17, 3
    %p103 = por %p101, %p102
    %p105 = scmp.ne.s32.totalorder %s88, %s104
    %p106 = scmp.eq.s32.totalorder %s17, 0
    %p107 = por %p105, %p106
    %s108 = ssub.s32 %s18, %s30
    %s109 = ssub.s32 %s19, %s26
    %s110 = sor.u32 %s108, %s109
    %p111 = scmp.eq.s32.totalorder %s110, 0
    %s113 = sadd.s32 %s112, 1
    %s114 = scalar_select %p111, %s112, %s113
    %p117 = pneg %p111
    %p118 = scmp.eq.s32.totalorder %s11, 3
    %p119 = por %p117, %p118
    %p120 = scmp.ne.s32.totalorder %s112, %s115
    %p121 = scmp.eq.s32.totalorder %s11, 0
    %p122 = por %p120, %p121
    %p123 = scmp.ne.s32.totalorder %s112, %s115
    %p124 = scmp.eq.s32.totalorder %s16, 3
    %p125 = por %p123, %p124
    %p126 = scmp.ne.s32.totalorder %s115, %s116
    %p127 = scmp.eq.s32.totalorder %s16, 0
    %p128 = por %p126, %p127
    %p129 = scmp.ne.s32.totalorder %s115, %s116
    %p130 = scmp.eq.s32.totalorder %s17, 3
    %p131 = por %p129, %p130
    %p133 = scmp.ne.s32.totalorder %s116, %s132
    %p134 = scmp.eq.s32.totalorder %s17, 0
    %p135 = por %p133, %p134
    %s136 = ssub.s32 %s18, %s30
    %s137 = ssub.s32 %s19, %s26
    %s138 = sor.u32 %s136, %s137
    %p139 = scmp.eq.s32.totalorder %s138, 0
    %s141 = sadd.s32 %s140, 1
    %s142 = scalar_select %p139, %s140, %s141
    %p145 = pneg %p139
    %p146 = scmp.eq.s32.totalorder %s11, 3
    %p147 = por %p145, %p146
    %p148 = scmp.ne.s32.totalorder %s140, %s143
    %p149 = scmp.eq.s32.totalorder %s11, 0
    %p150 = por %p148, %p149
    %p151 = scmp.ne.s32.totalorder %s140, %s143
    %p152 = scmp.eq.s32.totalorder %s16, 3
    %p153 = por %p151, %p152
    %p154 = scmp.ne.s32.totalorder %s143, %s144
    %p155 = scmp.eq.s32.totalorder %s16, 0
    %p156 = por %p154, %p155
    %p157 = scmp.ne.s32.totalorder %s143, %s144
    %p158 = scmp.eq.s32.totalorder %s17, 3
    %p159 = por %p157, %p158
    %p161 = scmp.ne.s32.totalorder %s144, %s160
    %p162 = scmp.eq.s32.totalorder %s17, 0
    %p163 = por %p161, %p162
    %p164 = scmp.le.s32.totalorder 1, %s11
    %p165 = scmp.lt.s32.totalorder %s11, 5
    %p166 = pnand %p164, %p165
    %p167 = pneg %p166
    // Predicated region
    $region9: #{cbr_forward.2} parent=5 // pred_check
      _
    $region10: #{cbr_forward.2} parent=5 // pred_check_branch
      %169 = sbr.rel (%p166) target = $region12
    $region11: #{cbr_forward.2} parent=5 // pred_region
      %s170 = ssub.s32 %s11, 1
      // Predicated region
      $region13: #{cbr_forward.2} parent=11 // pred_check
        %p171 = pneg %p72
      $region14: #{cbr_forward.2} parent=11 // pred_check_branch
        %173 = sbr.rel (%p171) target = $region16
      $region15: #{cbr_forward.2} parent=11 // pred_region
        _
      $region16: #{cbr_forward.2} parent=11 // pred_fallthru
        _
    $region12: #{cbr_forward.2} parent=5 // pred_fallthru
      _
    %p174 = scmp.lt.s32.totalorder %s11, 4
    // Predicated region
    $region17: #{cbr_forward.2} parent=5 // pred_check
      %p175 = pneg %p174
    $region18: #{cbr_forward.2} parent=5 // pred_check_branch
      %177 = sbr.rel (%p175) target = $region20
    $region19: #{cbr_forward.2} parent=5 // pred_region
      // Predicated region
      $region21: #{cbr_forward.2} parent=19 // pred_check
        %p178 = pneg %p45
      $region22: #{cbr_forward.2} parent=19 // pred_check_branch
        %180 = sbr.rel (%p178) target = $region24
      $region23: #{cbr_forward.2} parent=19 // pred_region
        %s181 = smul.u32 64, %s19
        %p182 = scmp.lt.s32.totalorder %s18, 1
        %s183 = scalar_select %p182, %s18, 1
        %p184 = scmp.lt.s32.totalorder %s181, 127
        %s185 = scalar_select %p184, %s181, 127
        %s186 = smul.addr %s183, 128
        %s187 = sadd.s32 %s185, %s186
        %s188 = smul.addr %s187, 4
        %s189 = scalar_lea.vmem %s0, %s188
        %s190 = smul.u32 64, %s19
      $region24: #{cbr_forward.2} parent=19 // pred_fallthru
        _
    $region20: #{cbr_forward.2} parent=5 // pred_fallthru
      _
    %p191 = scmp.le.s32.totalorder 1, %s11
    %p192 = scmp.lt.s32.totalorder %s11, 5
    %p193 = pnand %p191, %p192
    %p194 = pneg %p193
    // Predicated region
    $region25: #{cbr_forward.2} parent=5 // pred_check
      _
    $region26: #{cbr_forward.2} parent=5 // pred_check_branch
      %196 = sbr.rel (%p193) target = $region28
    $region27: #{cbr_forward.2} parent=5 // pred_region
      %s197 = ssub.s32 %s11, 1
      %s198 = smul.u32 64, %s21
      %p199 = scmp.lt.s32.totalorder %s20, 1
      %s200 = scalar_select %p199, %s20, 1
      %p201 = scmp.lt.s32.totalorder %s198, 127
      %s202 = scalar_select %p201, %s198, 127
      %s203 = smul.addr %s200, 128
      %s204 = sadd.s32 %s202, %s203
      %s205 = smul.addr %s204, 4
      %s206 = scalar_lea.vmem %s0, %s205
      %p207 = pneg %p51
      %p208 = pneg %p48
      %p209 = pneg %p72
      %p210 = pneg %p69
      %p211 = pneg %p100
      %p212 = pneg %p97
      %s213 = smul.u32 64, %s21
      %p214 = scmp.lt.s32.totalorder %s20, 1
      %s215 = scalar_select %p214, %s20, 1
      %p216 = scmp.lt.s32.totalorder %s213, 127
      %s217 = scalar_select %p216, %s213, 127
      %s218 = smul.addr %s215, 128
      %s219 = sadd.s32 %s217, %s218
      %s220 = smul.addr %s219, 8
      %s221 = scalar_lea.vmem %s2, %s220
      %p222 = pneg %p128
      %p223 = pneg %p125
      %p224 = scmp.lt.s32.totalorder %s20, 1
      %s225 = scalar_select %p224, %s20, 1
      %p226 = scmp.lt.s32.totalorder %s21, 1
      %s227 = scalar_select %p226, %s21, 1
      %s228 = smul.addr %s225, 2
      %s229 = sadd.s32 %s227, %s228
      %s230 = scalar_lea.vmem %s3, %s229
      %p231 = pneg %p156
      %p232 = pneg %p153
      %p233 = scmp.lt.s32.totalorder %s20, 1
      %s234 = scalar_select %p233, %s20, 1
      %p235 = scmp.lt.s32.totalorder %s21, 1
      %s236 = scalar_select %p235, %s21, 1
      %s237 = smul.addr %s234, 2
      %s238 = sadd.s32 %s236, %s237
      %s239 = scalar_lea.vmem %s4, %s238
      %s240 = smul.u32 64, %s21
      %p241 = scmp.lt.s32.totalorder %s20, 1
      %s242 = scalar_select %p241, %s20, 1
      %p243 = scmp.lt.s32.totalorder %s240, 127
      %s244 = scalar_select %p243, %s240, 127
      %s245 = smul.addr %s242, 128
      %s246 = sadd.s32 %s244, %s245
      %s247 = smul.addr %s246, 4
      %s248 = scalar_lea.vmem %s0, %s247
      %s249 = smul.u32 64, %s21
      %s250 = smul.u32 64, %s21
      %p251 = scmp.lt.s32.totalorder %s20, 1
      %s252 = scalar_select %p251, %s20, 1
      %p253 = scmp.lt.s32.totalorder %s250, 127
      %s254 = scalar_select %p253, %s250, 127
      %s255 = smul.addr %s252, 128
      %s256 = sadd.s32 %s254, %s255
      %s257 = smul.addr %s256, 8
      %s258 = scalar_lea.vmem %s2, %s257
      %s259 = smul.u32 64, %s21
      %p260 = scmp.lt.s32.totalorder %s20, 1
      %s261 = scalar_select %p260, %s20, 1
      %p262 = scmp.lt.s32.totalorder %s21, 1
      %s263 = scalar_select %p262, %s21, 1
      %s264 = smul.addr %s261, 2
      %s265 = sadd.s32 %s263, %s264
      %s266 = scalar_lea.vmem %s3, %s265
      %p267 = scmp.lt.s32.totalorder %s20, 1
      %s268 = scalar_select %p267, %s20, 1
      %p269 = scmp.lt.s32.totalorder %s21, 1
      %s270 = scalar_select %p269, %s21, 1
      %s271 = smul.addr %s268, 2
      %s272 = sadd.s32 %s270, %s271
      %s273 = scalar_lea.vmem %s4, %s272
      %v274 = vld [vmem:[%s248] sm:$0xf]
      %v275 = vld [vmem:[%s248 + $0x4] sm:$0xf]
      %v276 = vld [vmem:[%s248 + $0x8] sm:$0xf]
      %v277 = vld [vmem:[%s248 + $0xc] sm:$0xf]
      %v278 = vld [vmem:[%s248 + $0x10] sm:$0xf]
      %v279 = vld [vmem:[%s248 + $0x14] sm:$0xf]
      %v280 = vld [vmem:[%s248 + $0x18] sm:$0xf]
      %v281 = vld [vmem:[%s248 + $0x1c] sm:$0xf]
      %v282 = vld [vmem:[%s248 + $0x20] sm:$0xf]
      %v283 = vld [vmem:[%s248 + $0x24] sm:$0xf]
      %v284 = vld [vmem:[%s248 + $0x28] sm:$0xf]
      %v285 = vld [vmem:[%s248 + $0x2c] sm:$0xf]
      %v286 = vld [vmem:[%s248 + $0x30] sm:$0xf]
      %v287 = vld [vmem:[%s248 + $0x34] sm:$0xf]
      %v288 = vld [vmem:[%s248 + $0x38] sm:$0xf]
      %v289 = vld [vmem:[%s248 + $0x3c] sm:$0xf]
      %v290 = vld [vmem:[%s248 + $0x40] sm:$0xf]
      %v291 = vld [vmem:[%s248 + $0x44] sm:$0xf]
      %v292 = vld [vmem:[%s248 + $0x48] sm:$0xf]
      %v293 = vld [vmem:[%s248 + $0x4c] sm:$0xf]
      %v294 = vld [vmem:[%s248 + $0x50] sm:$0xf]
      %v295 = vld [vmem:[%s248 + $0x54] sm:$0xf]
      %v296 = vld [vmem:[%s248 + $0x58] sm:$0xf]
      %v297 = vld [vmem:[%s248 + $0x5c] sm:$0xf]
      %v298 = vld [vmem:[%s248 + $0x60] sm:$0xf]
      %v299 = vld [vmem:[%s248 + $0x64] sm:$0xf]
      %v300 = vld [vmem:[%s248 + $0x68] sm:$0xf]
      %v301 = vld [vmem:[%s248 + $0x6c] sm:$0xf]
      %v302 = vld [vmem:[%s248 + $0x70] sm:$0xf]
      %v303 = vld [vmem:[%s248 + $0x74] sm:$0xf]
      %v304 = vld [vmem:[%s248 + $0x78] sm:$0xf]
      %v305 = vld [vmem:[%s248 + $0x7c] sm:$0xf]
      %v306 = vld [vmem:[%s248 + $0x80] sm:$0xf]
      %v307 = vld [vmem:[%s248 + $0x84] sm:$0xf]
      %v308 = vld [vmem:[%s248 + $0x88] sm:$0xf]
      %v309 = vld [vmem:[%s248 + $0x8c] sm:$0xf]
      %v310 = vld [vmem:[%s248 + $0x90] sm:$0xf]
      %v311 = vld [vmem:[%s248 + $0x94] sm:$0xf]
      %v312 = vld [vmem:[%s248 + $0x98] sm:$0xf]
      %v313 = vld [vmem:[%s248 + $0x9c] sm:$0xf]
      %v314 = vld [vmem:[%s248 + $0xa0] sm:$0xf]
      %v315 = vld [vmem:[%s248 + $0xa4] sm:$0xf]
      %v316 = vld [vmem:[%s248 + $0xa8] sm:$0xf]
      %v317 = vld [vmem:[%s248 + $0xac] sm:$0xf]
      %v318 = vld [vmem:[%s248 + $0xb0] sm:$0xf]
      %v319 = vld [vmem:[%s248 + $0xb4] sm:$0xf]
      %v320 = vld [vmem:[%s248 + $0xb8] sm:$0xf]
      %v321 = vld [vmem:[%s248 + $0xbc] sm:$0xf]
      %v322 = vld [vmem:[%s248 + $0xc0] sm:$0xf]
      %v323 = vld [vmem:[%s248 + $0xc4] sm:$0xf]
      %v324 = vld [vmem:[%s248 + $0xc8] sm:$0xf]
      %v325 = vld [vmem:[%s248 + $0xcc] sm:$0xf]
      %v326 = vld [vmem:[%s248 + $0xd0] sm:$0xf]
      %v327 = vld [vmem:[%s248 + $0xd4] sm:$0xf]
      %v328 = vld [vmem:[%s248 + $0xd8] sm:$0xf]
      %v329 = vld [vmem:[%s248 + $0xdc] sm:$0xf]
      %v330 = vld [vmem:[%s248 + $0xe0] sm:$0xf]
      %v331 = vld [vmem:[%s248 + $0xe4] sm:$0xf]
      %v332 = vld [vmem:[%s248 + $0xe8] sm:$0xf]
      %v333 = vld [vmem:[%s248 + $0xec] sm:$0xf]
      %v334 = vld [vmem:[%s248 + $0xf0] sm:$0xf]
      %v335 = vld [vmem:[%s248 + $0xf4] sm:$0xf]
      %v336 = vld [vmem:[%s248 + $0xf8] sm:$0xf]
      %v337 = vld [vmem:[%s248 + $0xfc] sm:$0xf]
      %v338 = vld [vmem:[%s1] sm:$0xf]
      %v339 = vld [vmem:[%s1 + $0x4] sm:$0xf]
      %v340 = vld [vmem:[%s1 + $0x8] sm:$0xf]
      %v341 = vld [vmem:[%s1 + $0xc] sm:$0xf]
      %v342 = vld [vmem:[%s1 + $0x10] sm:$0xf]
      %v343 = vld [vmem:[%s1 + $0x14] sm:$0xf]
      %v344 = vld [vmem:[%s1 + $0x18] sm:$0xf]
      %v345 = vld [vmem:[%s1 + $0x1c] sm:$0xf]
      %v346 = vld [vmem:[%s1 + $0x20] sm:$0xf]
      %v347 = vld [vmem:[%s1 + $0x24] sm:$0xf]
      %v348 = vld [vmem:[%s1 + $0x28] sm:$0xf]
      %v349 = vld [vmem:[%s1 + $0x2c] sm:$0xf]
      %v350 = vld [vmem:[%s1 + $0x30] sm:$0xf]
      %v351 = vld [vmem:[%s1 + $0x34] sm:$0xf]
      %v352 = vld [vmem:[%s1 + $0x38] sm:$0xf]
      %v353 = vld [vmem:[%s1 + $0x3c] sm:$0xf]
      %v418 = vunpack.c.l.b16 %v274
      %v419 = vunpack.c.l.b16 %v275
      %v420 = vunpack.c.l.b16 %v276
      %v421 = vunpack.c.l.b16 %v277
      %v422 = vunpack.c.l.b16 %v278
      %v423 = vunpack.c.l.b16 %v279
      %v424 = vunpack.c.l.b16 %v280
      %v425 = vunpack.c.l.b16 %v281
      %v426 = vunpack.c.l.b16 %v282
      %v427 = vunpack.c.l.b16 %v283
      %v428 = vunpack.c.l.b16 %v284
      %v429 = vunpack.c.l.b16 %v285
      %v430 = vunpack.c.l.b16 %v286
      %v431 = vunpack.c.l.b16 %v287
      %v432 = vunpack.c.l.b16 %v288
      %v433 = vunpack.c.l.b16 %v289
      %v434 = vunpack.c.l.b16 %v290
      %v435 = vunpack.c.l.b16 %v291
      %v436 = vunpack.c.l.b16 %v292
      %v437 = vunpack.c.l.b16 %v293
      %v438 = vunpack.c.l.b16 %v294
      %v439 = vunpack.c.l.b16 %v295
      %v440 = vunpack.c.l.b16 %v296
      %v441 = vunpack.c.l.b16 %v297
      %v442 = vunpack.c.l.b16 %v298
      %v443 = vunpack.c.l.b16 %v299
      %v444 = vunpack.c.l.b16 %v300
      %v445 = vunpack.c.l.b16 %v301
      %v446 = vunpack.c.l.b16 %v302
      %v447 = vunpack.c.l.b16 %v303
      %v448 = vunpack.c.l.b16 %v304
      %v449 = vunpack.c.l.b16 %v305
      %v450 = vunpack.c.l.b16 %v306
      %v451 = vunpack.c.l.b16 %v307
      %v452 = vunpack.c.l.b16 %v308
      %v453 = vunpack.c.l.b16 %v309
      %v454 = vunpack.c.l.b16 %v310
      %v455 = vunpack.c.l.b16 %v311
      %v456 = vunpack.c.l.b16 %v312
      %v457 = vunpack.c.l.b16 %v313
      %v458 = vunpack.c.l.b16 %v314
      %v459 = vunpack.c.l.b16 %v315
      %v460 = vunpack.c.l.b16 %v316
      %v461 = vunpack.c.l.b16 %v317
      %v462 = vunpack.c.l.b16 %v318
      %v463 = vunpack.c.l.b16 %v319
      %v464 = vunpack.c.l.b16 %v320
      %v465 = vunpack.c.l.b16 %v321
      %v466 = vunpack.c.l.b16 %v322
      %v467 = vunpack.c.l.b16 %v323
      %v468 = vunpack.c.l.b16 %v324
      %v469 = vunpack.c.l.b16 %v325
      %v470 = vunpack.c.l.b16 %v326
      %v471 = vunpack.c.l.b16 %v327
      %v472 = vunpack.c.l.b16 %v328
      %v473 = vunpack.c.l.b16 %v329
      %v474 = vunpack.c.l.b16 %v330
      %v475 = vunpack.c.l.b16 %v331
      %v476 = vunpack.c.l.b16 %v332
      %v477 = vunpack.c.l.b16 %v333
      %v478 = vunpack.c.l.b16 %v334
      %v479 = vunpack.c.l.b16 %v335
      %v480 = vunpack.c.l.b16 %v336
      %v481 = vunpack.c.l.b16 %v337
      %v482 = vpack.c.b16 %v419, %v418
      %v483 = vpack.c.b16 %v421, %v420
      %v484 = vpack.c.b16 %v423, %v422
      %v485 = vpack.c.b16 %v425, %v424
      %v486 = vpack.c.b16 %v427, %v426
      %v487 = vpack.c.b16 %v429, %v428
      %v488 = vpack.c.b16 %v431, %v430
      %v489 = vpack.c.b16 %v433, %v432
      %v490 = vpack.c.b16 %v435, %v434
      %v491 = vpack.c.b16 %v437, %v436
      %v492 = vpack.c.b16 %v439, %v438
      %v493 = vpack.c.b16 %v441, %v440
      %v494 = vpack.c.b16 %v443, %v442
      %v495 = vpack.c.b16 %v445, %v444
      %v496 = vpack.c.b16 %v447, %v446
      %v497 = vpack.c.b16 %v449, %v448
      %v498 = vpack.c.b16 %v451, %v450
      %v499 = vpack.c.b16 %v453, %v452
      %v500 = vpack.c.b16 %v455, %v454
      %v501 = vpack.c.b16 %v457, %v456
      %v502 = vpack.c.b16 %v459, %v458
      %v503 = vpack.c.b16 %v461, %v460
      %v504 = vpack.c.b16 %v463, %v462
      %v505 = vpack.c.b16 %v465, %v464
      %v506 = vpack.c.b16 %v467, %v466
      %v507 = vpack.c.b16 %v469, %v468
      %v508 = vpack.c.b16 %v471, %v470
      %v509 = vpack.c.b16 %v473, %v472
      %v510 = vpack.c.b16 %v475, %v474
      %v511 = vpack.c.b16 %v477, %v476
      %v512 = vpack.c.b16 %v479, %v478
      %v513 = vpack.c.b16 %v481, %v480
      %v562 = vunpack.c.l.b16 %v338
      %v563 = vunpack.c.l.b16 %v339
      %v564 = vunpack.c.l.b16 %v340
      %v565 = vunpack.c.l.b16 %v341
      %v566 = vunpack.c.l.b16 %v342
      %v567 = vunpack.c.l.b16 %v343
      %v568 = vunpack.c.l.b16 %v344
      %v569 = vunpack.c.l.b16 %v345
      %v570 = vunpack.c.l.b16 %v346
      %v571 = vunpack.c.l.b16 %v347
      %v572 = vunpack.c.l.b16 %v348
      %v573 = vunpack.c.l.b16 %v349
      %v574 = vunpack.c.l.b16 %v350
      %v575 = vunpack.c.l.b16 %v351
      %v576 = vunpack.c.l.b16 %v352
      %v577 = vunpack.c.l.b16 %v353
      %v578 = vpack.c.b16 %v563, %v562
      %v579 = vpack.c.b16 %v565, %v564
      %v580 = vpack.c.b16 %v567, %v566
      %v581 = vpack.c.b16 %v569, %v568
      %v582 = vpack.c.b16 %v571, %v570
      %v583 = vpack.c.b16 %v573, %v572
      %v584 = vpack.c.b16 %v575, %v574
      %v585 = vpack.c.b16 %v577, %v576
      %594 = vmatpush.bf16.msra.mxu0 %v585
      %595 = vmatpush.bf16.msra.mxu0 %v584
      %596 = vmatpush.bf16.msra.mxu0 %v583
      %597 = vmatpush.bf16.msra.mxu0 %v582
      %598 = vmatpush.bf16.msra.mxu0 %v581
      %599 = vmatpush.bf16.msra.mxu0 %v580
      %600 = vmatpush.bf16.msra.mxu0 %v579
      %601 = vmatpush.bf16.msra.mxu0 %v578
      %602 = vmatmul.bf16.gmra.mxu0 %v482
      %v603 = vpop.f32.mrf.mxu0
      %v604 = vadd.f32 0.0, %v603
      %v605 = vpop.f32.mrf.mxu0
      %v606 = vadd.f32 0.0, %v605
      %607 = vmatmul.bf16.gmra.mxu0 %v483
      %v608 = vpop.f32.mrf.mxu0
      %v609 = vadd.f32 0.0, %v608
      %v610 = vpop.f32.mrf.mxu0
      %v611 = vadd.f32 0.0, %v610
      %612 = vmatmul.bf16.gmra.mxu0 %v484
      %v613 = vpop.f32.mrf.mxu0
      %v614 = vadd.f32 0.0, %v613
      %v615 = vpop.f32.mrf.mxu0
      %v616 = vadd.f32 0.0, %v615
      %617 = vmatmul.bf16.gmra.mxu0 %v485
      %v618 = vpop.f32.mrf.mxu0
      %v619 = vadd.f32 0.0, %v618
      %v620 = vpop.f32.mrf.mxu0
      %v621 = vadd.f32 0.0, %v620
      %622 = vmatmul.bf16.gmra.mxu0 %v486
      %v623 = vpop.f32.mrf.mxu0
      %v624 = vadd.f32 0.0, %v623
      %v625 = vpop.f32.mrf.mxu0
      %v626 = vadd.f32 0.0, %v625
      %627 = vmatmul.bf16.gmra.mxu0 %v487
      %v628 = vpop.f32.mrf.mxu0
      %v629 = vadd.f32 0.0, %v628
      %v630 = vpop.f32.mrf.mxu0
      %v631 = vadd.f32 0.0, %v630
      %632 = vmatmul.bf16.gmra.mxu0 %v488
      %v633 = vpop.f32.mrf.mxu0
      %v634 = vadd.f32 0.0, %v633
      %v635 = vpop.f32.mrf.mxu0
      %v636 = vadd.f32 0.0, %v635
      %637 = vmatmul.bf16.gmra.mxu0 %v489
      %v638 = vpop.f32.mrf.mxu0
      %v639 = vadd.f32 0.0, %v638
      %v640 = vpop.f32.mrf.mxu0
      %v641 = vadd.f32 0.0, %v640
      %642 = vmatmul.bf16.gmra.mxu0 %v490
      %v643 = vpop.f32.mrf.mxu0
      %v644 = vadd.f32 0.0, %v643
      %v645 = vpop.f32.mrf.mxu0
      %v646 = vadd.f32 0.0, %v645
      %647 = vmatmul.bf16.gmra.mxu0 %v491
      %v648 = vpop.f32.mrf.mxu0
      %v649 = vadd.f32 0.0, %v648
      %v650 = vpop.f32.mrf.mxu0
      %v651 = vadd.f32 0.0, %v650
      %652 = vmatmul.bf16.gmra.mxu0 %v492
      %v653 = vpop.f32.mrf.mxu0
      %v654 = vadd.f32 0.0, %v653
      %v655 = vpop.f32.mrf.mxu0
      %v656 = vadd.f32 0.0, %v655
      %657 = vmatmul.bf16.gmra.mxu0 %v493
      %v658 = vpop.f32.mrf.mxu0
      %v659 = vadd.f32 0.0, %v658
      %v660 = vpop.f32.mrf.mxu0
      %v661 = vadd.f32 0.0, %v660
      %662 = vmatmul.bf16.gmra.mxu0 %v494
      %v663 = vpop.f32.mrf.mxu0
      %v664 = vadd.f32 0.0, %v663
      %v665 = vpop.f32.mrf.mxu0
      %v666 = vadd.f32 0.0, %v665
      %667 = vmatmul.bf16.gmra.mxu0 %v495
      %v668 = vpop.f32.mrf.mxu0
      %v669 = vadd.f32 0.0, %v668
      %v670 = vpop.f32.mrf.mxu0
      %v671 = vadd.f32 0.0, %v670
      %672 = vmatmul.bf16.gmra.mxu0 %v496
      %v673 = vpop.f32.mrf.mxu0
      %v674 = vadd.f32 0.0, %v673
      %v675 = vpop.f32.mrf.mxu0
      %v676 = vadd.f32 0.0, %v675
      %677 = vmatmul.bf16.gmra.mxu0 %v497
      %v678 = vpop.f32.mrf.mxu0
      %v679 = vadd.f32 0.0, %v678
      %v680 = vpop.f32.mrf.mxu0
      %v681 = vadd.f32 0.0, %v680
      %682 = vmatmul.bf16.gmra.mxu0 %v498
      %v683 = vpop.f32.mrf.mxu0
      %v684 = vadd.f32 0.0, %v683
      %v685 = vpop.f32.mrf.mxu0
      %v686 = vadd.f32 0.0, %v685
      %687 = vmatmul.bf16.gmra.mxu0 %v499
      %v688 = vpop.f32.mrf.mxu0
      %v689 = vadd.f32 0.0, %v688
      %v690 = vpop.f32.mrf.mxu0
      %v691 = vadd.f32 0.0, %v690
      %692 = vmatmul.bf16.gmra.mxu0 %v500
      %v693 = vpop.f32.mrf.mxu0
      %v694 = vadd.f32 0.0, %v693
      %v695 = vpop.f32.mrf.mxu0
      %v696 = vadd.f32 0.0, %v695
      %697 = vmatmul.bf16.gmra.mxu0 %v501
      %v698 = vpop.f32.mrf.mxu0
      %v699 = vadd.f32 0.0, %v698
      %v700 = vpop.f32.mrf.mxu0
      %v701 = vadd.f32 0.0, %v700
      %702 = vmatmul.bf16.gmra.mxu0 %v502
      %v703 = vpop.f32.mrf.mxu0
      %v704 = vadd.f32 0.0, %v703
      %v705 = vpop.f32.mrf.mxu0
      %v706 = vadd.f32 0.0, %v705
      %707 = vmatmul.bf16.gmra.mxu0 %v503
      %v708 = vpop.f32.mrf.mxu0
      %v709 = vadd.f32 0.0, %v708
      %v710 = vpop.f32.mrf.mxu0
      %v711 = vadd.f32 0.0, %v710
      %712 = vmatmul.bf16.gmra.mxu0 %v504
      %v713 = vpop.f32.mrf.mxu0
      %v714 = vadd.f32 0.0, %v713
      %v715 = vpop.f32.mrf.mxu0
      %v716 = vadd.f32 0.0, %v715
      %717 = vmatmul.bf16.gmra.mxu0 %v505
      %v718 = vpop.f32.mrf.mxu0
      %v719 = vadd.f32 0.0, %v718
      %v720 = vpop.f32.mrf.mxu0
      %v721 = vadd.f32 0.0, %v720
      %722 = vmatmul.bf16.gmra.mxu0 %v506
      %v723 = vpop.f32.mrf.mxu0
      %v724 = vadd.f32 0.0, %v723
      %v725 = vpop.f32.mrf.mxu0
      %v726 = vadd.f32 0.0, %v725
      %727 = vmatmul.bf16.gmra.mxu0 %v507
      %v728 = vpop.f32.mrf.mxu0
      %v729 = vadd.f32 0.0, %v728
      %v730 = vpop.f32.mrf.mxu0
      %v731 = vadd.f32 0.0, %v730
      %732 = vmatmul.bf16.gmra.mxu0 %v508
      %v733 = vpop.f32.mrf.mxu0
      %v734 = vadd.f32 0.0, %v733
      %v735 = vpop.f32.mrf.mxu0
      %v736 = vadd.f32 0.0, %v735
      %737 = vmatmul.bf16.gmra.mxu0 %v509
      %v738 = vpop.f32.mrf.mxu0
      %v739 = vadd.f32 0.0, %v738
      %v740 = vpop.f32.mrf.mxu0
      %v741 = vadd.f32 0.0, %v740
      %742 = vmatmul.bf16.gmra.mxu0 %v510
      %v743 = vpop.f32.mrf.mxu0
      %v744 = vadd.f32 0.0, %v743
      %v745 = vpop.f32.mrf.mxu0
      %v746 = vadd.f32 0.0, %v745
      %747 = vmatmul.bf16.gmra.mxu0 %v511
      %v748 = vpop.f32.mrf.mxu0
      %v749 = vadd.f32 0.0, %v748
      %v750 = vpop.f32.mrf.mxu0
      %v751 = vadd.f32 0.0, %v750
      %752 = vmatmul.bf16.gmra.mxu0 %v512
      %v753 = vpop.f32.mrf.mxu0
      %v754 = vadd.f32 0.0, %v753
      %v755 = vpop.f32.mrf.mxu0
      %v756 = vadd.f32 0.0, %v755
      %757 = vmatmul.bf16.gmra.mxu0 %v513
      %v758 = vpop.f32.mrf.mxu0
      %v759 = vadd.f32 0.0, %v758
      %v760 = vpop.f32.mrf.mxu0
      %v761 = vadd.f32 0.0, %v760
      %762 = vdwg.mxu0
      %763 = vst [vmem:[%s258] sm:$0xff] %v604
      %764 = vst [vmem:[%s258 + $0x8] sm:$0xff] %v606
      %765 = vst [vmem:[%s258 + $0x10] sm:$0xff] %v609
      %766 = vst [vmem:[%s258 + $0x18] sm:$0xff] %v611
      %767 = vst [vmem:[%s258 + $0x20] sm:$0xff] %v614
      %768 = vst [vmem:[%s258 + $0x28] sm:$0xff] %v616
      %769 = vst [vmem:[%s258 + $0x30] sm:$0xff] %v619
      %770 = vst [vmem:[%s258 + $0x38] sm:$0xff] %v621
      %771 = vst [vmem:[%s258 + $0x40] sm:$0xff] %v624
      %772 = vst [vmem:[%s258 + $0x48] sm:$0xff] %v626
      %773 = vst [vmem:[%s258 + $0x50] sm:$0xff] %v629
      %774 = vst [vmem:[%s258 + $0x58] sm:$0xff] %v631
      %775 = vst [vmem:[%s258 + $0x60] sm:$0xff] %v634
      %776 = vst [vmem:[%s258 + $0x68] sm:$0xff] %v636
      %777 = vst [vmem:[%s258 + $0x70] sm:$0xff] %v639
      %778 = vst [vmem:[%s258 + $0x78] sm:$0xff] %v641
      %779 = vst [vmem:[%s258 + $0x80] sm:$0xff] %v644
      %780 = vst [vmem:[%s258 + $0x88] sm:$0xff] %v646
      %781 = vst [vmem:[%s258 + $0x90] sm:$0xff] %v649
      %782 = vst [vmem:[%s258 + $0x98] sm:$0xff] %v651
      %783 = vst [vmem:[%s258 + $0xa0] sm:$0xff] %v654
      %784 = vst [vmem:[%s258 + $0xa8] sm:$0xff] %v656
      %785 = vst [vmem:[%s258 + $0xb0] sm:$0xff] %v659
      %786 = vst [vmem:[%s258 + $0xb8] sm:$0xff] %v661
      %787 = vst [vmem:[%s258 + $0xc0] sm:$0xff] %v664
      %788 = vst [vmem:[%s258 + $0xc8] sm:$0xff] %v666
      %789 = vst [vmem:[%s258 + $0xd0] sm:$0xff] %v669
      %790 = vst [vmem:[%s258 + $0xd8] sm:$0xff] %v671
      %791 = vst [vmem:[%s258 + $0xe0] sm:$0xff] %v674
      %792 = vst [vmem:[%s258 + $0xe8] sm:$0xff] %v676
      %793 = vst [vmem:[%s258 + $0xf0] sm:$0xff] %v679
      %794 = vst [vmem:[%s258 + $0xf8] sm:$0xff] %v681
      %795 = vst [vmem:[%s258 + $0x100] sm:$0xff] %v684
      %796 = vst [vmem:[%s258 + $0x108] sm:$0xff] %v686
      %797 = vst [vmem:[%s258 + $0x110] sm:$0xff] %v689
      %798 = vst [vmem:[%s258 + $0x118] sm:$0xff] %v691
      %799 = vst [vmem:[%s258 + $0x120] sm:$0xff] %v694
      %800 = vst [vmem:[%s258 + $0x128] sm:$0xff] %v696
      %801 = vst [vmem:[%s258 + $0x130] sm:$0xff] %v699
      %802 = vst [vmem:[%s258 + $0x138] sm:$0xff] %v701
      %803 = vst [vmem:[%s258 + $0x140] sm:$0xff] %v704
      %804 = vst [vmem:[%s258 + $0x148] sm:$0xff] %v706
      %805 = vst [vmem:[%s258 + $0x150] sm:$0xff] %v709
      %806 = vst [vmem:[%s258 + $0x158] sm:$0xff] %v711
      %807 = vst [vmem:[%s258 + $0x160] sm:$0xff] %v714
      %808 = vst [vmem:[%s258 + $0x168] sm:$0xff] %v716
      %809 = vst [vmem:[%s258 + $0x170] sm:$0xff] %v719
      %810 = vst [vmem:[%s258 + $0x178] sm:$0xff] %v721
      %811 = vst [vmem:[%s258 + $0x180] sm:$0xff] %v724
      %812 = vst [vmem:[%s258 + $0x188] sm:$0xff] %v726
      %813 = vst [vmem:[%s258 + $0x190] sm:$0xff] %v729
      %814 = vst [vmem:[%s258 + $0x198] sm:$0xff] %v731
      %815 = vst [vmem:[%s258 + $0x1a0] sm:$0xff] %v734
      %816 = vst [vmem:[%s258 + $0x1a8] sm:$0xff] %v736
      %817 = vst [vmem:[%s258 + $0x1b0] sm:$0xff] %v739
      %818 = vst [vmem:[%s258 + $0x1b8] sm:$0xff] %v741
      %819 = vst [vmem:[%s258 + $0x1c0] sm:$0xff] %v744
      %820 = vst [vmem:[%s258 + $0x1c8] sm:$0xff] %v746
      %821 = vst [vmem:[%s258 + $0x1d0] sm:$0xff] %v749
      %822 = vst [vmem:[%s258 + $0x1d8] sm:$0xff] %v751
      %823 = vst [vmem:[%s258 + $0x1e0] sm:$0xff] %v754
      %824 = vst [vmem:[%s258 + $0x1e8] sm:$0xff] %v756
      %825 = vst [vmem:[%s258 + $0x1f0] sm:$0xff] %v759
      %826 = vst [vmem:[%s258 + $0x1f8] sm:$0xff] %v761
      %v827 = vadd.f32 %v604, %v606
      %v828 = vadd.f32 %v827, %v609
      %v829 = vadd.f32 %v828, %v611
      %v830 = vadd.f32 %v829, %v614
      %v831 = vadd.f32 %v830, %v616
      %v832 = vadd.f32 %v831, %v619
      %v833 = vadd.f32 %v832, %v621
      %v834 = vadd.f32 %v833, %v624
      %v835 = vadd.f32 %v834, %v626
      %v836 = vadd.f32 %v835, %v629
      %v837 = vadd.f32 %v836, %v631
      %v838 = vadd.f32 %v837, %v634
      %v839 = vadd.f32 %v838, %v636
      %v840 = vadd.f32 %v839, %v639
      %v841 = vadd.f32 %v840, %v641
      %v842 = vadd.f32 %v841, %v644
      %v843 = vadd.f32 %v842, %v646
      %v844 = vadd.f32 %v843, %v649
      %v845 = vadd.f32 %v844, %v651
      %v846 = vadd.f32 %v845, %v654
      %v847 = vadd.f32 %v846, %v656
      %v848 = vadd.f32 %v847, %v659
      %v849 = vadd.f32 %v848, %v661
      %v850 = vadd.f32 %v849, %v664
      %v851 = vadd.f32 %v850, %v666
      %v852 = vadd.f32 %v851, %v669
      %v853 = vadd.f32 %v852, %v671
      %v854 = vadd.f32 %v853, %v674
      %v855 = vadd.f32 %v854, %v676
      %v856 = vadd.f32 %v855, %v679
      %v857 = vadd.f32 %v856, %v681
      %v858 = vadd.f32 %v857, %v684
      %v859 = vadd.f32 %v858, %v686
      %v860 = vadd.f32 %v859, %v689
      %v861 = vadd.f32 %v860, %v691
      %v862 = vadd.f32 %v861, %v694
      %v863 = vadd.f32 %v862, %v696
      %v864 = vadd.f32 %v863, %v699
      %v865 = vadd.f32 %v864, %v701
      %v866 = vadd.f32 %v865, %v704
      %v867 = vadd.f32 %v866, %v706
      %v868 = vadd.f32 %v867, %v709
      %v869 = vadd.f32 %v868, %v711
      %v870 = vadd.f32 %v869, %v714
      %v871 = vadd.f32 %v870, %v716
      %v872 = vadd.f32 %v871, %v719
      %v873 = vadd.f32 %v872, %v721
      %v874 = vadd.f32 %v873, %v724
      %v875 = vadd.f32 %v874, %v726
      %v876 = vadd.f32 %v875, %v729
      %v877 = vadd.f32 %v876, %v731
      %v878 = vadd.f32 %v877, %v734
      %v879 = vadd.f32 %v878, %v736
      %v880 = vadd.f32 %v879, %v739
      %v881 = vadd.f32 %v880, %v741
      %v882 = vadd.f32 %v881, %v744
      %v883 = vadd.f32 %v882, %v746
      %v884 = vadd.f32 %v883, %v749
      %v885 = vadd.f32 %v884, %v751
      %v886 = vadd.f32 %v885, %v754
      %v887 = vadd.f32 %v886, %v756
      %v888 = vadd.f32 %v887, %v759
      %v889 = vadd.f32 %v888, %v761
      %v890 = vrot.slane %v889, 4
      %v891 = vadd.f32 %v889, %v890
      %v892 = vrot.slane %v891, 2
      %v893 = vadd.f32 %v891, %v892
      %v894 = vrot.slane %v893, 1
      %v895 = vadd.f32 %v893, %v894
      %896 = vst [vmem:[%s266] sm:$0x1] %v895
      %v897 = vmul.f32 %v604, %v604
      %v898 = vmul.f32 %v606, %v606
      %v899 = vmul.f32 %v609, %v609
      %v900 = vmul.f32 %v611, %v611
      %v901 = vmul.f32 %v614, %v614
      %v902 = vmul.f32 %v616, %v616
      %v903 = vmul.f32 %v619, %v619
      %v904 = vmul.f32 %v621, %v621
      %v905 = vmul.f32 %v624, %v624
      %v906 = vmul.f32 %v626, %v626
      %v907 = vmul.f32 %v629, %v629
      %v908 = vmul.f32 %v631, %v631
      %v909 = vmul.f32 %v634, %v634
      %v910 = vmul.f32 %v636, %v636
      %v911 = vmul.f32 %v639, %v639
      %v912 = vmul.f32 %v641, %v641
      %v913 = vmul.f32 %v644, %v644
      %v914 = vmul.f32 %v646, %v646
      %v915 = vmul.f32 %v649, %v649
      %v916 = vmul.f32 %v651, %v651
      %v917 = vmul.f32 %v654, %v654
      %v918 = vmul.f32 %v656, %v656
      %v919 = vmul.f32 %v659, %v659
      %v920 = vmul.f32 %v661, %v661
      %v921 = vmul.f32 %v664, %v664
      %v922 = vmul.f32 %v666, %v666
      %v923 = vmul.f32 %v669, %v669
      %v924 = vmul.f32 %v671, %v671
      %v925 = vmul.f32 %v674, %v674
      %v926 = vmul.f32 %v676, %v676
      %v927 = vmul.f32 %v679, %v679
      %v928 = vmul.f32 %v681, %v681
      %v929 = vmul.f32 %v684, %v684
      %v930 = vmul.f32 %v686, %v686
      %v931 = vmul.f32 %v689, %v689
      %v932 = vmul.f32 %v691, %v691
      %v933 = vmul.f32 %v694, %v694
      %v934 = vmul.f32 %v696, %v696
      %v935 = vmul.f32 %v699, %v699
      %v936 = vmul.f32 %v701, %v701
      %v937 = vmul.f32 %v704, %v704
      %v938 = vmul.f32 %v706, %v706
      %v939 = vmul.f32 %v709, %v709
      %v940 = vmul.f32 %v711, %v711
      %v941 = vmul.f32 %v714, %v714
      %v942 = vmul.f32 %v716, %v716
      %v943 = vmul.f32 %v719, %v719
      %v944 = vmul.f32 %v721, %v721
      %v945 = vmul.f32 %v724, %v724
      %v946 = vmul.f32 %v726, %v726
      %v947 = vmul.f32 %v729, %v729
      %v948 = vmul.f32 %v731, %v731
      %v949 = vmul.f32 %v734, %v734
      %v950 = vmul.f32 %v736, %v736
      %v951 = vmul.f32 %v739, %v739
      %v952 = vmul.f32 %v741, %v741
      %v953 = vmul.f32 %v744, %v744
      %v954 = vmul.f32 %v746, %v746
      %v955 = vmul.f32 %v749, %v749
      %v956 = vmul.f32 %v751, %v751
      %v957 = vmul.f32 %v754, %v754
      %v958 = vmul.f32 %v756, %v756
      %v959 = vmul.f32 %v759, %v759
      %v960 = vmul.f32 %v761, %v761
      %v961 = vadd.f32 %v897, %v898
      %v962 = vadd.f32 %v961, %v899
      %v963 = vadd.f32 %v962, %v900
      %v964 = vadd.f32 %v963, %v901
      %v965 = vadd.f32 %v964, %v902
      %v966 = vadd.f32 %v965, %v903
      %v967 = vadd.f32 %v966, %v904
      %v968 = vadd.f32 %v967, %v905
      %v969 = vadd.f32 %v968, %v906
      %v970 = vadd.f32 %v969, %v907
      %v971 = vadd.f32 %v970, %v908
      %v972 = vadd.f32 %v971, %v909
      %v973 = vadd.f32 %v972, %v910
      %v974 = vadd.f32 %v973, %v911
      %v975 = vadd.f32 %v974, %v912
      %v976 = vadd.f32 %v975, %v913
      %v977 = vadd.f32 %v976, %v914
      %v978 = vadd.f32 %v977, %v915
      %v979 = vadd.f32 %v978, %v916
      %v980 = vadd.f32 %v979, %v917
      %v981 = vadd.f32 %v980, %v918
      %v982 = vadd.f32 %v981, %v919
      %v983 = vadd.f32 %v982, %v920
      %v984 = vadd.f32 %v983, %v921
      %v985 = vadd.f32 %v984, %v922
      %v986 = vadd.f32 %v985, %v923
      %v987 = vadd.f32 %v986, %v924
      %v988 = vadd.f32 %v987, %v925
      %v989 = vadd.f32 %v988, %v926
      %v990 = vadd.f32 %v989, %v927
      %v991 = vadd.f32 %v990, %v928
      %v992 = vadd.f32 %v991, %v929
      %v993 = vadd.f32 %v992, %v930
      %v994 = vadd.f32 %v993, %v931
      %v995 = vadd.f32 %v994, %v932
      %v996 = vadd.f32 %v995, %v933
      %v997 = vadd.f32 %v996, %v934
      %v998 = vadd.f32 %v997, %v935
      %v999 = vadd.f32 %v998, %v936
      %v1000 = vadd.f32 %v999, %v937
      %v1001 = vadd.f32 %v1000, %v938
      %v1002 = vadd.f32 %v1001, %v939
      %v1003 = vadd.f32 %v1002, %v940
      %v1004 = vadd.f32 %v1003, %v941
      %v1005 = vadd.f32 %v1004, %v942
      %v1006 = vadd.f32 %v1005, %v943
      %v1007 = vadd.f32 %v1006, %v944
      %v1008 = vadd.f32 %v1007, %v945
      %v1009 = vadd.f32 %v1008, %v946
      %v1010 = vadd.f32 %v1009, %v947
      %v1011 = vadd.f32 %v1010, %v948
      %v1012 = vadd.f32 %v1011, %v949
      %v1013 = vadd.f32 %v1012, %v950
      %v1014 = vadd.f32 %v1013, %v951
      %v1015 = vadd.f32 %v1014, %v952
      %v1016 = vadd.f32 %v1015, %v953
      %v1017 = vadd.f32 %v1016, %v954
      %v1018 = vadd.f32 %v1017, %v955
      %v1019 = vadd.f32 %v1018, %v956
      %v1020 = vadd.f32 %v1019, %v957
      %v1021 = vadd.f32 %v1020, %v958
      %v1022 = vadd.f32 %v1021, %v959
      %v1023 = vadd.f32 %v1022, %v960
      %v1024 = vrot.slane %v1023, 4
      %v1025 = vadd.f32 %v1023, %v1024
      %v1026 = vrot.slane %v1025, 2
      %v1027 = vadd.f32 %v1025, %v1026
      %v1028 = vrot.slane %v1027, 1
      %v1029 = vadd.f32 %v1027, %v1028
      %1030 = vst [vmem:[%s273] sm:$0x1] %v1029
      %s1031 = smul.u32 64, %s21
      %p1032 = scmp.lt.s32.totalorder %s20, 1
      %s1033 = scalar_select %p1032, %s20, 1
      %p1034 = scmp.lt.s32.totalorder %s1031, 127
      %s1035 = scalar_select %p1034, %s1031, 127
      %s1036 = smul.addr %s1033, 128
      %s1037 = sadd.s32 %s1035, %s1036
      %s1038 = smul.addr %s1037, 8
      %s1039 = scalar_lea.vmem %s2, %s1038
      %p1040 = scmp.lt.s32.totalorder %s20, 1
      %s1041 = scalar_select %p1040, %s20, 1
      %p1042 = scmp.lt.s32.totalorder %s21, 1
      %s1043 = scalar_select %p1042, %s21, 1
      %s1044 = smul.addr %s1041, 2
      %s1045 = sadd.s32 %s1043, %s1044
      %s1046 = scalar_lea.vmem %s3, %s1045
      %p1047 = scmp.lt.s32.totalorder %s20, 1
      %s1048 = scalar_select %p1047, %s20, 1
      %p1049 = scmp.lt.s32.totalorder %s21, 1
      %s1050 = scalar_select %p1049, %s21, 1
      %s1051 = smul.addr %s1048, 2
      %s1052 = sadd.s32 %s1050, %s1051
      %s1053 = scalar_lea.vmem %s4, %s1052
      // Predicated region
      $region29: #{cbr_forward.2} parent=27 // pred_check
        %p1054 = pneg %p97
      $region30: #{cbr_forward.2} parent=27 // pred_check_branch
        %1056 = sbr.rel (%p1054) target = $region32
      $region31: #{cbr_forward.2} parent=27 // pred_region
        %s1057 = smul.u32 64, %s21
      $region32: #{cbr_forward.2} parent=27 // pred_fallthru
        _
      // Predicated region
      $region33: #{cbr_forward.2} parent=27 // pred_check
        %p1058 = pneg %p125
      $region34: #{cbr_forward.2} parent=27 // pred_check_branch
        %1060 = sbr.rel (%p1058) target = $region36
      $region35: #{cbr_forward.2} parent=27 // pred_region
        _
      $region36: #{cbr_forward.2} parent=27 // pred_fallthru
        _
      // Predicated region
      $region37: #{cbr_forward.2} parent=27 // pred_check
        %p1061 = pneg %p153
      $region38: #{cbr_forward.2} parent=27 // pred_check_branch
        %1063 = sbr.rel (%p1061) target = $region40
      $region39: #{cbr_forward.2} parent=27 // pred_region
        _
      $region40: #{cbr_forward.2} parent=27 // pred_fallthru
        _
    $region28: #{cbr_forward.2} parent=5 // pred_fallthru
      _
    %p1064 = scmp.le.s32.totalorder 2, %s11
    // Predicated region
    $region41: #{cbr_forward.2} parent=5 // pred_check
      %p1065 = pneg %p1064
    $region42: #{cbr_forward.2} parent=5 // pred_check_branch
      %1067 = sbr.rel (%p1065) target = $region44
    $region43: #{cbr_forward.2} parent=5 // pred_region
      %s1068 = ssub.s32 %s11, 2
      // Predicated region
      $region45: #{cbr_forward.2} parent=43 // pred_check
        %p1069 = pneg %p103
      $region46: #{cbr_forward.2} parent=43 // pred_check_branch
        %1071 = sbr.rel (%p1069) target = $region48
      $region47: #{cbr_forward.2} parent=43 // pred_region
        %s1072 = smul.u32 64, %s23
        %p1073 = scmp.lt.s32.totalorder %s22, 1
        %s1074 = scalar_select %p1073, %s22, 1
        %p1075 = scmp.lt.s32.totalorder %s1072, 127
        %s1076 = scalar_select %p1075, %s1072, 127
        %s1077 = smul.addr %s1074, 128
        %s1078 = sadd.s32 %s1076, %s1077
        %s1079 = smul.addr %s1078, 8
        %s1080 = scalar_lea.vmem %s2, %s1079
      $region48: #{cbr_forward.2} parent=43 // pred_fallthru
        _
      // Predicated region
      $region49: #{cbr_forward.2} parent=43 // pred_check
        %p1081 = pneg %p131
      $region50: #{cbr_forward.2} parent=43 // pred_check_branch
        %1083 = sbr.rel (%p1081) target = $region52
      $region51: #{cbr_forward.2} parent=43 // pred_region
        %p1084 = scmp.lt.s32.totalorder %s22, 1
        %s1085 = scalar_select %p1084, %s22, 1
        %p1086 = scmp.lt.s32.totalorder %s23, 1
        %s1087 = scalar_select %p1086, %s23, 1
        %s1088 = smul.addr %s1085, 2
        %s1089 = sadd.s32 %s1087, %s1088
        %s1090 = scalar_lea.vmem %s3, %s1089
      $region52: #{cbr_forward.2} parent=43 // pred_fallthru
        _
      // Predicated region
      $region53: #{cbr_forward.2} parent=43 // pred_check
        %p1091 = pneg %p159
      $region54: #{cbr_forward.2} parent=43 // pred_check_branch
        %1093 = sbr.rel (%p1091) target = $region56
      $region55: #{cbr_forward.2} parent=43 // pred_region
        %p1094 = scmp.lt.s32.totalorder %s22, 1
        %s1095 = scalar_select %p1094, %s22, 1
        %p1096 = scmp.lt.s32.totalorder %s23, 1
        %s1097 = scalar_select %p1096, %s23, 1
        %s1098 = smul.addr %s1095, 2
        %s1099 = sadd.s32 %s1097, %s1098
        %s1100 = scalar_lea.vmem %s4, %s1099
      $region56: #{cbr_forward.2} parent=43 // pred_fallthru
        _
    $region44: #{cbr_forward.2} parent=5 // pred_fallthru
      _
  $region6: #{cbr_forward.2} parent=0 // loop_footer
    %s15 = sadd.s32 1, %s11
  $region7: #{cbr_forward.2} parent=0 // loop_footer_branch
    %10 = sbr.rel target = $region3
  $region8: #{cbr_forward.2} parent=0 // loop_exit
    _

</llo_original>
